<compile_context>
chip_gen: v5e
topology: v5e:2x2
jax: 0.10.0
libtpu: 0.0.40
codegen_flags: <defaults>
</compile_context>

<pallas_src>
import functools

import jax
import jax.numpy as jnp
import numpy as np
from jax.experimental import pallas as pl
from jax.experimental.pallas import tpu as pltpu

EPS = 1e-3  # BatchNorm3d(eps=0.001)


def _conv_stats_kernel(x_ref, w_ref, y_ref, stats_ref, *, k, Ho, Wo):
    """Grid = (N, Do, kd). One output depth-plane per (n, do); kd is the reduction axis.

    x_ref:     (1, 1, Hp, Wp, Cin) bf16  padded input slice at depth do + kd
    w_ref:     (1, k*k, Cout, Cin) bf16  weights of depth-tap kd
    y_ref:     (1, 1, Cout, Ho*Wo) f32   conv output plane (lane-dense), revisited over kd
    stats_ref: (1, 1, Cout, 2)     f32   per-plane [sum, sum_sq], written on last kd
    """
    kd = pl.program_id(2)
    cout = w_ref.shape[2]

    @pl.when(kd == 0)
    def _init():
        y_ref[...] = jnp.zeros_like(y_ref)

    slab = x_ref[0, 0]                                   # (Hp, Wp, Cin) bf16
    acc = jnp.zeros((cout, Ho * Wo), jnp.float32)
    for kh in range(k):
        for kw in range(k):
            xs = slab[kh:kh + Ho, kw:kw + Wo, :]         # (Ho, Wo, Cin)
            xs = xs.reshape(Ho * Wo, xs.shape[-1])       # (Ho*Wo, Cin)
            wt = w_ref[0, kh * k + kw]                   # (Cout, Cin)
            acc = acc + jax.lax.dot_general(
                wt, xs, (((1,), (1,)), ((), ())),        # contract Cin on the MXU
                preferred_element_type=jnp.float32)      # (Cout, Ho*Wo) f32 accum

    y_ref[0, 0] = y_ref[0, 0] + acc

    @pl.when(kd == k - 1)
    def _finalize():
        y = y_ref[0, 0]                                  # final conv plane, f32, hot
        s1 = jnp.sum(y, axis=1, keepdims=True)           # (Cout, 1)
        s2 = jnp.sum(y * y, axis=1, keepdims=True)       # (Cout, 1)
        stats_ref[0, 0] = jnp.concatenate([s1, s2], axis=1)


def _bn_relu_kernel(y_ref, scale_ref, shift_ref, o_ref):
    """Grid = (N, Do). Fused BN affine + ReLU: out = max(y*scale + shift, 0)."""
    y = y_ref[0, 0]                                      # (Cout, Ho*Wo) f32
    o_ref[0, 0] = jnp.maximum(y * scale_ref[...] + shift_ref[...], 0.0)


@functools.partial(jax.jit, static_argnames=("kernel_size", "stride", "padding"))
def basic_conv3d(x, conv_w, bn_gamma, bn_beta, *, kernel_size=3, stride=1, padding=1):
    """x: (N, Cin, D, H, W) f32; conv_w: (Cout, Cin, k, k, k) (PyTorch OIDHW)."""
    N, Cin, D, H, W = x.shape
    Cout = conv_w.shape[0]
    k = int(kernel_size)
    pad = int(padding)
    if stride != 1:
        # TODO(synk): stride > 1 needs strided window loads (pl.ds(..., stride=)) in the tap loop.
        raise NotImplementedError("Pallas BasicConv3d kernel currently supports stride=1 only.")

    Dp, Hp, Wp = D + 2 * pad, H + 2 * pad, W + 2 * pad
    Do, Ho, Wo = Dp - k + 1, Hp - k + 1, Wp - k + 1
    HW = Ho * Wo

    # NCDHW -> NDHWC, zero-pad spatial dims, cast to bf16 MXU operands.
    x_pad = jnp.pad(jnp.transpose(x, (0, 2, 3, 4, 1)),
                    ((0, 0), (pad, pad), (pad, pad), (pad, pad), (0, 0)))
    x_pad = x_pad.astype(jnp.bfloat16)

    # (Cout, Cin, kd, kh, kw) -> (kd, kh*kw, Cout, Cin), bf16.
    w_r = jnp.transpose(conv_w, (2, 3, 4, 0, 1)).reshape(k, k * k, Cout, Cin)
    w_r = w_r.astype(jnp.bfloat16)

    kern = functools.partial(_conv_stats_kernel, k=k, Ho=Ho, Wo=Wo)
    y_conv, stats = pl.pallas_call(
        kern,
        grid=(N, Do, k),
        in_specs=[
            pl.BlockSpec((1, 1, Hp, Wp, Cin),
                         lambda n, d, kd: (n, d + kd, 0, 0, 0)),
            pl.BlockSpec((1, k * k, Cout, Cin),
                         lambda n, d, kd: (kd, 0, 0, 0)),
        ],
        out_specs=[
            pl.BlockSpec((1, 1, Cout, HW), lambda n, d, kd: (n, d, 0, 0)),
            pl.BlockSpec((1, 1, Cout, 2), lambda n, d, kd: (n, d, 0, 0)),
        ],
        out_shape=[
            jax.ShapeDtypeStruct((N, Do, Cout, HW), jnp.float32),
            jax.ShapeDtypeStruct((N, Do, Cout, 2), jnp.float32),
        ],
        compiler_params=pltpu.CompilerParams(
            dimension_semantics=("parallel", "parallel", "arbitrary")),
    )(x_pad, w_r)

    # BatchNorm3d training-mode batch stats (biased variance), tiny combine in XLA.
    s = jnp.sum(stats, axis=(0, 1))                       # (Cout, 2)
    count = float(N * Do * Ho * Wo)
    mean = s[:, 0] / count
    var = s[:, 1] / count - mean * mean
    inv = jax.lax.rsqrt(var + EPS)
    scale_v = bn_gamma.astype(jnp.float32) * inv          # (Cout,)
    shift_v = bn_beta.astype(jnp.float32) - mean * scale_v
    scale = scale_v.reshape(Cout, 1)
    shift = shift_v.reshape(Cout, 1)

    y_out = pl.pallas_call(
        _bn_relu_kernel,
        grid=(N, Do),
        in_specs=[
            pl.BlockSpec((1, 1, Cout, HW), lambda n, d: (n, d, 0, 0)),
            pl.BlockSpec((Cout, 1), lambda n, d: (0, 0)),
            pl.BlockSpec((Cout, 1), lambda n, d: (0, 0)),
        ],
        out_specs=pl.BlockSpec((1, 1, Cout, HW), lambda n, d: (n, d, 0, 0)),
        out_shape=jax.ShapeDtypeStruct((N, Do, Cout, HW), jnp.float32),
        input_output_aliases={0: 0},   # normalize in place; no second HBM buffer
        compiler_params=pltpu.CompilerParams(
            dimension_semantics=("parallel", "parallel")),
    )(y_conv, scale, shift)

    # (N, Do, Cout, Ho*Wo) -> PyTorch NCDHW.
    out = y_out.reshape(N, Do, Cout, Ho, Wo).transpose(0, 2, 1, 3, 4)
    return out


def _reference(x, conv_w, gamma, beta, stride=1, padding=1):
    """Pure-JAX reference of BasicConv3d.forward (train mode).

    Inputs are rounded to bf16 (the kernel's MXU operand precision) and the math is
    done in exact f32, so the comparison isolates kernel correctness from the
    intentional bf16 input rounding.
    """
    xr = x.astype(jnp.bfloat16).astype(jnp.float32)
    wr = conv_w.astype(jnp.bfloat16).astype(jnp.float32)
    y = jax.lax.conv_general_dilated(
        xr, wr,
        window_strides=(stride,) * 3,
        padding=((padding, padding),) * 3,
        dimension_numbers=("NCDHW", "OIDHW", "NCDHW"),
        precision=jax.lax.Precision.HIGHEST)
    mean = y.mean(axis=(0, 2, 3, 4), keepdims=True)
    var = ((y - mean) ** 2).mean(axis=(0, 2, 3, 4), keepdims=True)  # biased
    y = (y - mean) / jnp.sqrt(var + EPS)
    y = y * gamma.reshape(1, -1, 1, 1, 1) + beta.reshape(1, -1, 1, 1, 1)
    return jnp.maximum(y, 0.0)


if __name__ == "__main__":
    # Small shapes consistent with Conv3d(in=4, out=8, kernel_size=3, padding=1).
    N, Cin, Cout = 2, 4, 8
    D = H = W = 16          # Ho*Wo = 256 -> lane-dense (multiple of 128) output blocks
    k, stride, pad = 3, 1, 1

    key = jax.random.PRNGKey(0)
    key_x, key_w, key_g, key_b = jax.random.split(key, 4)
    x = jax.random.normal(key_x, (N, Cin, D, H, W), dtype=jnp.float32)
    conv_w = 0.1 * jax.random.normal(key_w, (Cout, Cin, k, k, k), dtype=jnp.float32)
    # Non-trivial BN affine to exercise the fused scale/shift epilogue.
    bn_gamma = 1.0 + 0.1 * jax.random.normal(key_g, (Cout,), dtype=jnp.float32)
    bn_beta = 0.1 * jax.random.normal(key_b, (Cout,), dtype=jnp.float32)

    out = basic_conv3d(x, conv_w, bn_gamma, bn_beta,
                       kernel_size=k, stride=stride, padding=pad)
    out = jax.block_until_ready(out)

    ref = jax.block_until_ready(
        _reference(x, conv_w, bn_gamma, bn_beta, stride=stride, padding=pad))

    assert out.shape == (N, Cout, D, H, W), out.shape
    np.testing.assert_allclose(np.asarray(out), np.asarray(ref), atol=2e-3, rtol=2e-3)

    print("KERNEL_OK")
</pallas_src>

<mosaic_0001>
module attributes {stable_mosaic.version = 11 : i64} {
  func.func @_conv_stats_kernel(%arg0: i32, %arg1: i32, %arg2: i32, %arg3: memref<1x1x18x18x4xbf16, #tpu.memory_space<vmem>>, %arg4: memref<1x9x8x4xbf16, #tpu.memory_space<vmem>>, %arg5: memref<1x1x8x256xf32, #tpu.memory_space<vmem>>, %arg6: memref<1x1x8x2xf32, #tpu.memory_space<vmem>>) attributes {dimension_semantics = [#tpu.dimension_semantics<parallel>, #tpu.dimension_semantics<parallel>, #tpu.dimension_semantics<arbitrary>], iteration_bounds = array<i64: 2, 16, 3>, scalar_prefetch = 0 : i64, scratch_operands = 0 : i64, tpu.core_type = #tpu.core_type<tc>, window_params = [{transform_indices = @transform_0, window_bounds = array<i64: 1, 1, 18, 18, 4>}, {transform_indices = @transform_1, window_bounds = array<i64: 1, 9, 8, 4>}, {transform_indices = @transform_2, window_bounds = array<i64: 1, 1, 8, 256>}, {transform_indices = @transform_3, window_bounds = array<i64: 1, 1, 8, 2>}]} {
    %c0_i32 = arith.constant 0 : i32
    %0 = arith.cmpi eq, %arg2, %c0_i32 : i32
    %1 = arith.extui %0 : i1 to i32
    %c0_i32_0 = arith.constant 0 : i32
    %2 = arith.cmpi ne, %1, %c0_i32_0 : i32
    scf.if %2 {
      %cst_51 = arith.constant 0.000000e+00 : f32
      %69 = vector.broadcast %cst_51 : f32 to vector<1x1x8x256xf32>
      %c0_52 = arith.constant 0 : index
      %c0_53 = arith.constant 0 : index
      %c0_54 = arith.constant 0 : index
      %c0_55 = arith.constant 0 : index
      %70 = vector.load %arg5[%c0_52, %c0_53, %c0_54, %c0_55] : memref<1x1x8x256xf32, #tpu.memory_space<vmem>>, vector<1x1x8x256xf32>
      tpu.vector_store %arg5[%c0_52, %c0_53, %c0_54, %c0_55], %69 {strides = array<i32>} : memref<1x1x8x256xf32, #tpu.memory_space<vmem>>, vector<1x1x8x256xf32>,
    } else {
    }
    %c0 = arith.constant 0 : index
    %c0_1 = arith.constant 0 : index
    %c0_2 = arith.constant 0 : index
    %c0_3 = arith.constant 0 : index
    %c0_4 = arith.constant 0 : index
    %3 = vector.load %arg3[%c0, %c0_1, %c0_2, %c0_3, %c0_4] : memref<1x1x18x18x4xbf16, #tpu.memory_space<vmem>>, vector<1x1x18x18x4xbf16>
    %4 = vector.shape_cast %3 : vector<1x1x18x18x4xbf16> to vector<18x18x4xbf16>
    %cst = arith.constant 0.000000e+00 : f32
    %5 = vector.broadcast %cst : f32 to vector<8x256xf32>
    %6 = vector.extract_strided_slice %4 {offsets = [0, 0, 0], sizes = [16, 16, 4], strides = [1, 1, 1]} : vector<18x18x4xbf16> to vector<16x16x4xbf16>
    %7 = vector.shape_cast %6 : vector<16x16x4xbf16> to vector<256x4xbf16>
    %c0_5 = arith.constant 0 : index
    %c0_6 = arith.constant 0 : index
    %c0_7 = arith.constant 0 : index
    %c0_8 = arith.constant 0 : index
    %8 = vector.load %arg4[%c0_5, %c0_6, %c0_7, %c0_8] : memref<1x9x8x4xbf16, #tpu.memory_space<vmem>>, vector<1x1x8x4xbf16>
    %9 = vector.shape_cast %8 : vector<1x1x8x4xbf16> to vector<8x4xbf16>
    %cst_9 = arith.constant dense<0.000000e+00> : vector<8x256xf32>
    %10 = tpu.matmul %9, %7, %cst_9 {dimension_numbers = #tpu.dot_dimension_numbers<[1], [1], [0], [0], [0, 0, 1, 0], [], []>} : vector<8x4xbf16>, vector<256x4xbf16>, vector<8x256xf32> -> vector<8x256xf32>
    %11 = arith.addf %5, %10 : vector<8x256xf32>
    %12 = vector.extract_strided_slice %4 {offsets = [0, 1, 0], sizes = [16, 16, 4], strides = [1, 1, 1]} : vector<18x18x4xbf16> to vector<16x16x4xbf16>
    %13 = vector.shape_cast %12 : vector<16x16x4xbf16> to vector<256x4xbf16>
    %c0_10 = arith.constant 0 : index
    %c1 = arith.constant 1 : index
    %c0_11 = arith.constant 0 : index
    %c0_12 = arith.constant 0 : index
    %14 = vector.load %arg4[%c0_10, %c1, %c0_11, %c0_12] : memref<1x9x8x4xbf16, #tpu.memory_space<vmem>>, vector<1x1x8x4xbf16>
    %15 = vector.shape_cast %14 : vector<1x1x8x4xbf16> to vector<8x4xbf16>
    %cst_13 = arith.constant dense<0.000000e+00> : vector<8x256xf32>
    %16 = tpu.matmul %15, %13, %cst_13 {dimension_numbers = #tpu.dot_dimension_numbers<[1], [1], [0], [0], [0, 0, 1, 0], [], []>} : vector<8x4xbf16>, vector<256x4xbf16>, vector<8x256xf32> -> vector<8x256xf32>
    %17 = arith.addf %11, %16 : vector<8x256xf32>
    %18 = vector.extract_strided_slice %4 {offsets = [0, 2, 0], sizes = [16, 16, 4], strides = [1, 1, 1]} : vector<18x18x4xbf16> to vector<16x16x4xbf16>
    %19 = vector.shape_cast %18 : vector<16x16x4xbf16> to vector<256x4xbf16>
    %c0_14 = arith.constant 0 : index
    %c2 = arith.constant 2 : index
    %c0_15 = arith.constant 0 : index
    %c0_16 = arith.constant 0 : index
    %20 = vector.load %arg4[%c0_14, %c2, %c0_15, %c0_16] : memref<1x9x8x4xbf16, #tpu.memory_space<vmem>>, vector<1x1x8x4xbf16>
    %21 = vector.shape_cast %20 : vector<1x1x8x4xbf16> to vector<8x4xbf16>
    %cst_17 = arith.constant dense<0.000000e+00> : vector<8x256xf32>
    %22 = tpu.matmul %21, %19, %cst_17 {dimension_numbers = #tpu.dot_dimension_numbers<[1], [1], [0], [0], [0, 0, 1, 0], [], []>} : vector<8x4xbf16>, vector<256x4xbf16>, vector<8x256xf32> -> vector<8x256xf32>
    %23 = arith.addf %17, %22 : vector<8x256xf32>
    %24 = vector.extract_strided_slice %4 {offsets = [1, 0, 0], sizes = [16, 16, 4], strides = [1, 1, 1]} : vector<18x18x4xbf16> to vector<16x16x4xbf16>
    %25 = vector.shape_cast %24 : vector<16x16x4xbf16> to vector<256x4xbf16>
    %c0_18 = arith.constant 0 : index
    %c3 = arith.constant 3 : index
    %c0_19 = arith.constant 0 : index
    %c0_20 = arith.constant 0 : index
    %26 = vector.load %arg4[%c0_18, %c3, %c0_19, %c0_20] : memref<1x9x8x4xbf16, #tpu.memory_space<vmem>>, vector<1x1x8x4xbf16>
    %27 = vector.shape_cast %26 : vector<1x1x8x4xbf16> to vector<8x4xbf16>
    %cst_21 = arith.constant dense<0.000000e+00> : vector<8x256xf32>
    %28 = tpu.matmul %27, %25, %cst_21 {dimension_numbers = #tpu.dot_dimension_numbers<[1], [1], [0], [0], [0, 0, 1, 0], [], []>} : vector<8x4xbf16>, vector<256x4xbf16>, vector<8x256xf32> -> vector<8x256xf32>
    %29 = arith.addf %23, %28 : vector<8x256xf32>
    %30 = vector.extract_strided_slice %4 {offsets = [1, 1, 0], sizes = [16, 16, 4], strides = [1, 1, 1]} : vector<18x18x4xbf16> to vector<16x16x4xbf16>
    %31 = vector.shape_cast %30 : vector<16x16x4xbf16> to vector<256x4xbf16>
    %c0_22 = arith.constant 0 : index
    %c4 = arith.constant 4 : index
    %c0_23 = arith.constant 0 : index
    %c0_24 = arith.constant 0 : index
    %32 = vector.load %arg4[%c0_22, %c4, %c0_23, %c0_24] : memref<1x9x8x4xbf16, #tpu.memory_space<vmem>>, vector<1x1x8x4xbf16>
    %33 = vector.shape_cast %32 : vector<1x1x8x4xbf16> to vector<8x4xbf16>
    %cst_25 = arith.constant dense<0.000000e+00> : vector<8x256xf32>
    %34 = tpu.matmul %33, %31, %cst_25 {dimension_numbers = #tpu.dot_dimension_numbers<[1], [1], [0], [0], [0, 0, 1, 0], [], []>} : vector<8x4xbf16>, vector<256x4xbf16>, vector<8x256xf32> -> vector<8x256xf32>
    %35 = arith.addf %29, %34 : vector<8x256xf32>
    %36 = vector.extract_strided_slice %4 {offsets = [1, 2, 0], sizes = [16, 16, 4], strides = [1, 1, 1]} : vector<18x18x4xbf16> to vector<16x16x4xbf16>
    %37 = vector.shape_cast %36 : vector<16x16x4xbf16> to vector<256x4xbf16>
    %c0_26 = arith.constant 0 : index
    %c5 = arith.constant 5 : index
    %c0_27 = arith.constant 0 : index
    %c0_28 = arith.constant 0 : index
    %38 = vector.load %arg4[%c0_26, %c5, %c0_27, %c0_28] : memref<1x9x8x4xbf16, #tpu.memory_space<vmem>>, vector<1x1x8x4xbf16>
    %39 = vector.shape_cast %38 : vector<1x1x8x4xbf16> to vector<8x4xbf16>
    %cst_29 = arith.constant dense<0.000000e+00> : vector<8x256xf32>
    %40 = tpu.matmul %39, %37, %cst_29 {dimension_numbers = #tpu.dot_dimension_numbers<[1], [1], [0], [0], [0, 0, 1, 0], [], []>} : vector<8x4xbf16>, vector<256x4xbf16>, vector<8x256xf32> -> vector<8x256xf32>
    %41 = arith.addf %35, %40 : vector<8x256xf32>
    %42 = vector.extract_strided_slice %4 {offsets = [2, 0, 0], sizes = [16, 16, 4], strides = [1, 1, 1]} : vector<18x18x4xbf16> to vector<16x16x4xbf16>
    %43 = vector.shape_cast %42 : vector<16x16x4xbf16> to vector<256x4xbf16>
    %c0_30 = arith.constant 0 : index
    %c6 = arith.constant 6 : index
    %c0_31 = arith.constant 0 : index
    %c0_32 = arith.constant 0 : index
    %44 = vector.load %arg4[%c0_30, %c6, %c0_31, %c0_32] : memref<1x9x8x4xbf16, #tpu.memory_space<vmem>>, vector<1x1x8x4xbf16>
    %45 = vector.shape_cast %44 : vector<1x1x8x4xbf16> to vector<8x4xbf16>
    %cst_33 = arith.constant dense<0.000000e+00> : vector<8x256xf32>
    %46 = tpu.matmul %45, %43, %cst_33 {dimension_numbers = #tpu.dot_dimension_numbers<[1], [1], [0], [0], [0, 0, 1, 0], [], []>} : vector<8x4xbf16>, vector<256x4xbf16>, vector<8x256xf32> -> vector<8x256xf32>
    %47 = arith.addf %41, %46 : vector<8x256xf32>
    %48 = vector.extract_strided_slice %4 {offsets = [2, 1, 0], sizes = [16, 16, 4], strides = [1, 1, 1]} : vector<18x18x4xbf16> to vector<16x16x4xbf16>
    %49 = vector.shape_cast %48 : vector<16x16x4xbf16> to vector<256x4xbf16>
    %c0_34 = arith.constant 0 : index
    %c7 = arith.constant 7 : index
    %c0_35 = arith.constant 0 : index
    %c0_36 = arith.constant 0 : index
    %50 = vector.load %arg4[%c0_34, %c7, %c0_35, %c0_36] : memref<1x9x8x4xbf16, #tpu.memory_space<vmem>>, vector<1x1x8x4xbf16>
    %51 = vector.shape_cast %50 : vector<1x1x8x4xbf16> to vector<8x4xbf16>
    %cst_37 = arith.constant dense<0.000000e+00> : vector<8x256xf32>
    %52 = tpu.matmul %51, %49, %cst_37 {dimension_numbers = #tpu.dot_dimension_numbers<[1], [1], [0], [0], [0, 0, 1, 0], [], []>} : vector<8x4xbf16>, vector<256x4xbf16>, vector<8x256xf32> -> vector<8x256xf32>
    %53 = arith.addf %47, %52 : vector<8x256xf32>
    %54 = vector.extract_strided_slice %4 {offsets = [2, 2, 0], sizes = [16, 16, 4], strides = [1, 1, 1]} : vector<18x18x4xbf16> to vector<16x16x4xbf16>
    %55 = vector.shape_cast %54 : vector<16x16x4xbf16> to vector<256x4xbf16>
    %c0_38 = arith.constant 0 : index
    %c8 = arith.constant 8 : index
    %c0_39 = arith.constant 0 : index
    %c0_40 = arith.constant 0 : index
    %56 = vector.load %arg4[%c0_38, %c8, %c0_39, %c0_40] : memref<1x9x8x4xbf16, #tpu.memory_space<vmem>>, vector<1x1x8x4xbf16>
    %57 = vector.shape_cast %56 : vector<1x1x8x4xbf16> to vector<8x4xbf16>
    %cst_41 = arith.constant dense<0.000000e+00> : vector<8x256xf32>
    %58 = tpu.matmul %57, %55, %cst_41 {dimension_numbers = #tpu.dot_dimension_numbers<[1], [1], [0], [0], [0, 0, 1, 0], [], []>} : vector<8x4xbf16>, vector<256x4xbf16>, vector<8x256xf32> -> vector<8x256xf32>
    %59 = arith.addf %53, %58 : vector<8x256xf32>
    %c0_42 = arith.constant 0 : index
    %c0_43 = arith.constant 0 : index
    %c0_44 = arith.constant 0 : index
    %c0_45 = arith.constant 0 : index
    %60 = vector.load %arg5[%c0_42, %c0_43, %c0_44, %c0_45] : memref<1x1x8x256xf32, #tpu.memory_space<vmem>>, vector<1x1x8x256xf32>
    %61 = vector.shape_cast %60 : vector<1x1x8x256xf32> to vector<8x256xf32>
    %62 = arith.addf %61, %59 : vector<8x256xf32>
    %c0_46 = arith.constant 0 : index
    %c0_47 = arith.constant 0 : index
    %c0_48 = arith.constant 0 : index
    %c0_49 = arith.constant 0 : index
    %63 = vector.load %arg5[%c0_46, %c0_47, %c0_48, %c0_49] : memref<1x1x8x256xf32, #tpu.memory_space<vmem>>, vector<1x1x8x256xf32>
    %64 = vector.shape_cast %63 : vector<1x1x8x256xf32> to vector<8x256xf32>
    %65 = vector.shape_cast %62 : vector<8x256xf32> to vector<1x1x8x256xf32>
    tpu.vector_store %arg5[%c0_46, %c0_47, %c0_48, %c0_49], %65 {strides = array<i32>} : memref<1x1x8x256xf32, #tpu.memory_space<vmem>>, vector<1x1x8x256xf32>,
    %c2_i32 = arith.constant 2 : i32
    %66 = arith.cmpi eq, %arg2, %c2_i32 : i32
    %67 = arith.extui %66 : i1 to i32
    %c0_i32_50 = arith.constant 0 : i32
    %68 = arith.cmpi ne, %67, %c0_i32_50 : i32
    scf.if %68 {
      %c0_51 = arith.constant 0 : index
      %c0_52 = arith.constant 0 : index
      %c0_53 = arith.constant 0 : index
      %c0_54 = arith.constant 0 : index
      %69 = vector.load %arg5[%c0_51, %c0_52, %c0_53, %c0_54] : memref<1x1x8x256xf32, #tpu.memory_space<vmem>>, vector<1x1x8x256xf32>
      %70 = vector.shape_cast %69 : vector<1x1x8x256xf32> to vector<8x256xf32>
      %cst_55 = arith.constant dense<0.000000e+00> : vector<8xf32>
      %71 = vector.multi_reduction <add>, %70, %cst_55 [1] : vector<8x256xf32> to vector<8xf32>
      %72 = vector.shape_cast %71 : vector<8xf32> to vector<8x1xf32>
      %73 = arith.mulf %70, %70 : vector<8x256xf32>
      %cst_56 = arith.constant dense<0.000000e+00> : vector<8xf32>
      %74 = vector.multi_reduction <add>, %73, %cst_56 [1] : vector<8x256xf32> to vector<8xf32>
      %75 = vector.shape_cast %74 : vector<8xf32> to vector<8x1xf32>
      %76 = tpu.concatenate %72, %75 in 1 : vector<8x1xf32>, vector<8x1xf32> -> vector<8x2xf32>
      %c0_57 = arith.constant 0 : index
      %c0_58 = arith.constant 0 : index
      %c0_59 = arith.constant 0 : index
      %c0_60 = arith.constant 0 : index
      %77 = vector.load %arg6[%c0_57, %c0_58, %c0_59, %c0_60] : memref<1x1x8x2xf32, #tpu.memory_space<vmem>>, vector<1x1x8x2xf32>
      %78 = vector.shape_cast %77 : vector<1x1x8x2xf32> to vector<8x2xf32>
      %79 = vector.shape_cast %76 : vector<8x2xf32> to vector<1x1x8x2xf32>
      tpu.vector_store %arg6[%c0_57, %c0_58, %c0_59, %c0_60], %79 {strides = array<i32>} : memref<1x1x8x2xf32, #tpu.memory_space<vmem>>, vector<1x1x8x2xf32>,
    } else {
    }
    return
  }
  func.func @transform_0(%arg0: i32, %arg1: i32, %arg2: i32) -> (i32, i32, i32, i32, i32) {
    %0 = arith.addi %arg1, %arg2 : i32
    %c0_i32 = arith.constant 0 : i32
    %c0_i32_0 = arith.constant 0 : i32
    %c0_i32_1 = arith.constant 0 : i32
    %c0_i32_2 = arith.constant 0 : i32
    return %arg0, %0, %c0_i32, %c0_i32_0, %c0_i32_1 : i32, i32, i32, i32, i32
  }
  func.func @transform_1(%arg0: i32, %arg1: i32, %arg2: i32) -> (i32, i32, i32, i32) {
    %c0_i32 = arith.constant 0 : i32
    %c0_i32_0 = arith.constant 0 : i32
    %c0_i32_1 = arith.constant 0 : i32
    %c0_i32_2 = arith.constant 0 : i32
    return %arg2, %c0_i32, %c0_i32_0, %c0_i32_1 : i32, i32, i32, i32
  }
  func.func @transform_2(%arg0: i32, %arg1: i32, %arg2: i32) -> (i32, i32, i32, i32) {
    %c0_i32 = arith.constant 0 : i32
    %c0_i32_0 = arith.constant 0 : i32
    %c0_i32_1 = arith.constant 0 : i32
    return %arg0, %arg1, %c0_i32, %c0_i32_0 : i32, i32, i32, i32
  }
  func.func @transform_3(%arg0: i32, %arg1: i32, %arg2: i32) -> (i32, i32, i32, i32) {
    %c0_i32 = arith.constant 0 : i32
    %c0_i32_0 = arith.constant 0 : i32
    %c0_i32_1 = arith.constant 0 : i32
    return %arg0, %arg1, %c0_i32, %c0_i32_0 : i32, i32, i32, i32
  }
}

module attributes {stable_mosaic.version = 11 : i64} {
  func.func @_bn_relu_kernel(%arg0: i32, %arg1: i32, %arg2: memref<1x1x8x256xf32, #tpu.memory_space<vmem>>, %arg3: memref<8x1xf32, #tpu.memory_space<vmem>>, %arg4: memref<8x1xf32, #tpu.memory_space<vmem>>, %arg5: memref<1x1x8x256xf32, #tpu.memory_space<vmem>>) attributes {dimension_semantics = [#tpu.dimension_semantics<parallel>, #tpu.dimension_semantics<parallel>], iteration_bounds = array<i64: 2, 16>, scalar_prefetch = 0 : i64, scratch_operands = 0 : i64, tpu.core_type = #tpu.core_type<tc>, window_params = [{transform_indices = @transform_0, window_bounds = array<i64: 1, 1, 8, 256>}, {pipeline_mode = #tpu.pipeline_mode<synchronous>, transform_indices = @transform_1, window_bounds = array<i64: 8, 1>}, {pipeline_mode = #tpu.pipeline_mode<synchronous>, transform_indices = @transform_2, window_bounds = array<i64: 8, 1>}, {transform_indices = @transform_3, window_bounds = array<i64: 1, 1, 8, 256>}]} {
    %c0 = arith.constant 0 : index
    %c0_0 = arith.constant 0 : index
    %c0_1 = arith.constant 0 : index
    %c0_2 = arith.constant 0 : index
    %0 = vector.load %arg2[%c0, %c0_0, %c0_1, %c0_2] : memref<1x1x8x256xf32, #tpu.memory_space<vmem>>, vector<1x1x8x256xf32>
    %1 = vector.shape_cast %0 : vector<1x1x8x256xf32> to vector<8x256xf32>
    %c0_3 = arith.constant 0 : index
    %c0_4 = arith.constant 0 : index
    %2 = vector.load %arg3[%c0_3, %c0_4] : memref<8x1xf32, #tpu.memory_space<vmem>>, vector<8x1xf32>
    %3 = vector.broadcast %2 : vector<8x1xf32> to vector<8x256xf32>
    %4 = arith.mulf %1, %3 : vector<8x256xf32>
    %c0_5 = arith.constant 0 : index
    %c0_6 = arith.constant 0 : index
    %5 = vector.load %arg4[%c0_5, %c0_6] : memref<8x1xf32, #tpu.memory_space<vmem>>, vector<8x1xf32>
    %6 = vector.broadcast %5 : vector<8x1xf32> to vector<8x256xf32>
    %7 = arith.addf %4, %6 : vector<8x256xf32>
    %cst = arith.constant 0.000000e+00 : f32
    %8 = vector.broadcast %cst : f32 to vector<8x256xf32>
    %9 = arith.maximumf %7, %8 : vector<8x256xf32>
    %c0_7 = arith.constant 0 : index
    %c0_8 = arith.constant 0 : index
    %c0_9 = arith.constant 0 : index
    %c0_10 = arith.constant 0 : index
    %10 = vector.load %arg5[%c0_7, %c0_8, %c0_9, %c0_10] : memref<1x1x8x256xf32, #tpu.memory_space<vmem>>, vector<1x1x8x256xf32>
    %11 = vector.shape_cast %10 : vector<1x1x8x256xf32> to vector<8x256xf32>
    %12 = vector.shape_cast %9 : vector<8x256xf32> to vector<1x1x8x256xf32>
    tpu.vector_store %arg5[%c0_7, %c0_8, %c0_9, %c0_10], %12 {strides = array<i32>} : memref<1x1x8x256xf32, #tpu.memory_space<vmem>>, vector<1x1x8x256xf32>,
    return
  }
  func.func @transform_0(%arg0: i32, %arg1: i32) -> (i32, i32, i32, i32) {
    %c0_i32 = arith.constant 0 : i32
    %c0_i32_0 = arith.constant 0 : i32
    %c0_i32_1 = arith.constant 0 : i32
    return %arg0, %arg1, %c0_i32, %c0_i32_0 : i32, i32, i32, i32
  }
  func.func @transform_1(%arg0: i32, %arg1: i32) -> (i32, i32) {
    %c0_i32 = arith.constant 0 : i32
    %c0_i32_0 = arith.constant 0 : i32
    %c0_i32_1 = arith.constant 0 : i32
    return %c0_i32, %c0_i32_0 : i32, i32
  }
  func.func @transform_2(%arg0: i32, %arg1: i32) -> (i32, i32) {
    %c0_i32 = arith.constant 0 : i32
    %c0_i32_0 = arith.constant 0 : i32
    %c0_i32_1 = arith.constant 0 : i32
    return %c0_i32, %c0_i32_0 : i32, i32
  }
  func.func @transform_3(%arg0: i32, %arg1: i32) -> (i32, i32, i32, i32) {
    %c0_i32 = arith.constant 0 : i32
    %c0_i32_0 = arith.constant 0 : i32
    %c0_i32_1 = arith.constant 0 : i32
    return %arg0, %arg1, %c0_i32, %c0_i32_0 : i32, i32, i32, i32
  }
}

</mosaic_0001>

<llo_original>
// kernel: basic_conv3d.3
$region0: #{basic_conv3d.3}
  #allocation0 [shape = 'u32[]', space=smem, size = 0x4, offset = 0x4, fixed_abs, tag = 'smem constant byte address 0x4 - core index']
  #allocation1 [shape = 'u32[72,128]{1,0:T(1,128)}', space=vmem, size = 0x9000, scoped, tag = 'internal scratch']
  %s0 = inlined_call_operand.vmem [shape: f32[2,16,8,256], index: 0, kind: input, shape index: {}, may-alias: {0,3}]
  %s1 = inlined_call_operand.vmem [shape: f32[8,1], index: 1, kind: input, shape index: {}]
  %s2 = inlined_call_operand.vmem [shape: f32[8,1], index: 2, kind: input, shape index: {}]
  %s3 = inlined_call_operand.vmem [shape: f32[2,16,8,256], index: 3, kind: output, shape index: {}, may-alias: {0,3}]
  %s4 = sld [smem:[#allocation0]]
  $region45: #{basic_conv3d.3} parent=0
    _
  %s6 = ssub.s32 1, %s4
  %s7 = scalar_select 0, %s6, %s4
  loop: start=0, step=1, limit=34
  $region2: #{basic_conv3d.3} parent=0 // loop_pre_header
    _
  $region3: #{basic_conv3d.3} parent=0 // loop_header
    %s9 = sphi 0, %s13
    %p10 = scmp.ge.s32.totalorder %s9, 34
    %s16 = sphi 0, %s28
    %s17 = sphi 0, %s24
    %s18 = sphi 0, %s16
    %s19 = sphi 0, %s17
    %s20 = sphi 0, %s18
    %s21 = sphi 0, %s19
    %s33 = sphi 0, %s35
    %s36 = sphi 0, %s33
    %s37 = sphi 0, %s36
    %s53 = sphi 0, %s37
    %s57 = sphi 0, %s57
    %s59 = sphi 0, %s57
    %s60 = sphi 0, %s59
    %s74 = sphi 0, %s60
    %s78 = sphi 0, %s78
    %s80 = sphi 0, %s78
    %s81 = sphi 0, %s80
    %s95 = sphi 0, %s81
    %s103 = sphi 0, %s105
    %s106 = sphi 0, %s103
    %s107 = sphi 0, %s106
    %s123 = sphi 0, %s107
  $region4: #{basic_conv3d.3} parent=0 // loop_header_branch
    %12 = sbr.rel (%p10) target = $region8
  $region5: #{basic_conv3d.3} parent=0 // loop_body
    %s14 = ssub.s32 %s9, 1
    %s15 = ssub.s32 %s9, 2
    %s22 = sadd.s32 1, %s17
    %p23 = scmp.ge.s32.totalorder %s22, 16
    %s24 = scalar_select %p23, 0, %s22
    %s25 = sadd.s32 1, %s16
    %s26 = scalar_select %p23, %s25, %s16
    %p27 = scmp.ge.s32.totalorder %s26, 2
    %s28 = scalar_select %p27, 0, %s26
    %s29 = ssub.s32 %s16, %s28
    %s30 = ssub.s32 %s17, %s24
    %s31 = sor.u32 %s29, %s30
    %p32 = scmp.eq.s32.totalorder %s31, 0
    %s34 = sadd.s32 %s33, 1
    %s35 = scalar_select %p32, %s33, %s34
    %p38 = pneg %p32
    %p39 = scmp.eq.s32.totalorder %s9, 31
    %p40 = por %p38, %p39
    %p41 = scmp.ne.s32.totalorder %s33, %s36
    %p42 = scmp.eq.s32.totalorder %s9, 0
    %p43 = por %p41, %p42
    %p44 = scmp.ne.s32.totalorder %s33, %s36
    %p45 = scmp.eq.s32.totalorder %s14, 31
    %p46 = por %p44, %p45
    %p47 = scmp.ne.s32.totalorder %s36, %s37
    %p48 = scmp.eq.s32.totalorder %s14, 0
    %p49 = por %p47, %p48
    %p50 = scmp.ne.s32.totalorder %s36, %s37
    %p51 = scmp.eq.s32.totalorder %s15, 31
    %p52 = por %p50, %p51
    %p54 = scmp.ne.s32.totalorder %s37, %s53
    %p55 = scmp.eq.s32.totalorder %s15, 0
    %p56 = por %p54, %p55
    %s58 = sadd.s32 %s57, 1
    %p61 = scmp.eq.s32.totalorder %s9, 31
    %p62 = scmp.ne.s32.totalorder %s57, %s59
    %p63 = scmp.eq.s32.totalorder %s9, 0
    %p64 = por %p62, %p63
    %p65 = scmp.ne.s32.totalorder %s57, %s59
    %p66 = scmp.eq.s32.totalorder %s14, 31
    %p67 = por %p65, %p66
    %p68 = scmp.ne.s32.totalorder %s59, %s60
    %p69 = scmp.eq.s32.totalorder %s14, 0
    %p70 = por %p68, %p69
    %p71 = scmp.ne.s32.totalorder %s59, %s60
    %p72 = scmp.eq.s32.totalorder %s15, 31
    %p73 = por %p71, %p72
    %p75 = scmp.ne.s32.totalorder %s60, %s74
    %p76 = scmp.eq.s32.totalorder %s15, 0
    %p77 = por %p75, %p76
    %s79 = sadd.s32 %s78, 1
    %p82 = scmp.eq.s32.totalorder %s9, 31
    %p83 = scmp.ne.s32.totalorder %s78, %s80
    %p84 = scmp.eq.s32.totalorder %s9, 0
    %p85 = por %p83, %p84
    %p86 = scmp.ne.s32.totalorder %s78, %s80
    %p87 = scmp.eq.s32.totalorder %s14, 31
    %p88 = por %p86, %p87
    %p89 = scmp.ne.s32.totalorder %s80, %s81
    %p90 = scmp.eq.s32.totalorder %s14, 0
    %p91 = por %p89, %p90
    %p92 = scmp.ne.s32.totalorder %s80, %s81
    %p93 = scmp.eq.s32.totalorder %s15, 31
    %p94 = por %p92, %p93
    %p96 = scmp.ne.s32.totalorder %s81, %s95
    %p97 = scmp.eq.s32.totalorder %s15, 0
    %p98 = por %p96, %p97
    %s99 = ssub.s32 %s16, %s28
    %s100 = ssub.s32 %s17, %s24
    %s101 = sor.u32 %s99, %s100
    %p102 = scmp.eq.s32.totalorder %s101, 0
    %s104 = sadd.s32 %s103, 1
    %s105 = scalar_select %p102, %s103, %s104
    %p108 = pneg %p102
    %p109 = scmp.eq.s32.totalorder %s9, 31
    %p110 = por %p108, %p109
    %p111 = scmp.ne.s32.totalorder %s103, %s106
    %p112 = scmp.eq.s32.totalorder %s9, 0
    %p113 = por %p111, %p112
    %p114 = scmp.ne.s32.totalorder %s103, %s106
    %p115 = scmp.eq.s32.totalorder %s14, 31
    %p116 = por %p114, %p115
    %p117 = scmp.ne.s32.totalorder %s106, %s107
    %p118 = scmp.eq.s32.totalorder %s14, 0
    %p119 = por %p117, %p118
    %p120 = scmp.ne.s32.totalorder %s106, %s107
    %p121 = scmp.eq.s32.totalorder %s15, 31
    %p122 = por %p120, %p121
    %p124 = scmp.ne.s32.totalorder %s107, %s123
    %p125 = scmp.eq.s32.totalorder %s15, 0
    %p126 = por %p124, %p125
    %p127 = scmp.le.s32.totalorder 1, %s9
    %p128 = scmp.lt.s32.totalorder %s9, 33
    %p129 = pnand %p127, %p128
    %p130 = pneg %p129
    // Predicated region
    $region9: #{basic_conv3d.3} parent=5 // pred_check
      _
    $region10: #{basic_conv3d.3} parent=5 // pred_check_branch
      %132 = sbr.rel (%p129) target = $region12
    $region11: #{basic_conv3d.3} parent=5 // pred_region
      %s133 = ssub.s32 %s9, 1
      // Predicated region
      $region13: #{basic_conv3d.3} parent=11 // pred_check
        %p134 = pneg %p70
      $region14: #{basic_conv3d.3} parent=11 // pred_check_branch
        %136 = sbr.rel (%p134) target = $region16
      $region15: #{basic_conv3d.3} parent=11 // pred_region
        _
      $region16: #{basic_conv3d.3} parent=11 // pred_fallthru
        _
      // Predicated region
      $region17: #{basic_conv3d.3} parent=11 // pred_check
        %p137 = pneg %p91
      $region18: #{basic_conv3d.3} parent=11 // pred_check_branch
        %139 = sbr.rel (%p137) target = $region20
      $region19: #{basic_conv3d.3} parent=11 // pred_region
        _
      $region20: #{basic_conv3d.3} parent=11 // pred_fallthru
        _
    $region12: #{basic_conv3d.3} parent=5 // pred_fallthru
      _
    %p140 = scmp.lt.s32.totalorder %s9, 32
    // Predicated region
    $region21: #{basic_conv3d.3} parent=5 // pred_check
      %p141 = pneg %p140
    $region22: #{basic_conv3d.3} parent=5 // pred_check_branch
      %143 = sbr.rel (%p141) target = $region24
    $region23: #{basic_conv3d.3} parent=5 // pred_region
      // Predicated region
      $region25: #{basic_conv3d.3} parent=23 // pred_check
        %p144 = pneg %p43
      $region26: #{basic_conv3d.3} parent=23 // pred_check_branch
        %146 = sbr.rel (%p144) target = $region28
      $region27: #{basic_conv3d.3} parent=23 // pred_region
        %p147 = scmp.lt.s32.totalorder %s16, 1
        %s148 = scalar_select %p147, %s16, 1
        %p149 = scmp.lt.s32.totalorder %s17, 15
        %s150 = scalar_select %p149, %s17, 15
        %s151 = smul.addr %s150, 2
        %s152 = smul.addr %s148, 32
        %s153 = sadd.s32 %s151, %s152
        %s154 = smul.addr %s153, 8
        %s155 = scalar_lea.vmem %s0, %s154
      $region28: #{basic_conv3d.3} parent=23 // pred_fallthru
        _
    $region24: #{basic_conv3d.3} parent=5 // pred_fallthru
      _
    %p156 = scmp.le.s32.totalorder 1, %s9
    %p157 = scmp.lt.s32.totalorder %s9, 33
    %p158 = pnand %p156, %p157
    %p159 = pneg %p158
    // Predicated region
    $region29: #{basic_conv3d.3} parent=5 // pred_check
      _
    $region30: #{basic_conv3d.3} parent=5 // pred_check_branch
      %161 = sbr.rel (%p158) target = $region32
    $region31: #{basic_conv3d.3} parent=5 // pred_region
      %s162 = ssub.s32 %s9, 1
      %p163 = scmp.lt.s32.totalorder %s18, 1
      %s164 = scalar_select %p163, %s18, 1
      %p165 = scmp.lt.s32.totalorder %s19, 15
      %s166 = scalar_select %p165, %s19, 15
      %s167 = smul.addr %s166, 2
      %s168 = smul.addr %s164, 32
      %s169 = sadd.s32 %s167, %s168
      %s170 = smul.addr %s169, 8
      %s171 = scalar_lea.vmem %s0, %s170
      %p172 = pneg %p49
      %p173 = pneg %p46
      %p174 = pneg %p70
      %p175 = pneg %p67
      %p176 = pneg %p91
      %p177 = pneg %p88
      %p178 = pneg %p119
      %p179 = pneg %p116
      %p180 = scmp.lt.s32.totalorder %s18, 1
      %s181 = scalar_select %p180, %s18, 1
      %p182 = scmp.lt.s32.totalorder %s19, 15
      %s183 = scalar_select %p182, %s19, 15
      %s184 = smul.addr %s183, 2
      %s185 = smul.addr %s181, 32
      %s186 = sadd.s32 %s184, %s185
      %s187 = smul.addr %s186, 8
      %s188 = scalar_lea.vmem %s3, %s187
      %p189 = scmp.lt.s32.totalorder %s18, 1
      %s190 = scalar_select %p189, %s18, 1
      %p191 = scmp.lt.s32.totalorder %s19, 15
      %s192 = scalar_select %p191, %s19, 15
      %s193 = smul.addr %s192, 2
      %s194 = smul.addr %s190, 32
      %s195 = sadd.s32 %s193, %s194
      %s196 = smul.addr %s195, 8
      %s197 = scalar_lea.vmem %s0, %s196
      %p198 = scmp.lt.s32.totalorder %s18, 1
      %s199 = scalar_select %p198, %s18, 1
      %p200 = scmp.lt.s32.totalorder %s19, 15
      %s201 = scalar_select %p200, %s19, 15
      %s202 = smul.addr %s201, 2
      %s203 = smul.addr %s199, 32
      %s204 = sadd.s32 %s202, %s203
      %s205 = smul.addr %s204, 8
      %s206 = scalar_lea.vmem %s3, %s205
      %v207 = vld [vmem:[%s197] sm:$0xff]
      %v208 = vld [vmem:[%s197 + $0x8] sm:$0xff]
      %v209 = vld [vmem:[%s1] sm:$0xff]
      %211 = vset.pattern.permute.xlu0 0
      %212 = vperm.xlu0 %211, %v209
      %v213 = vpop.permute.xlu0 %212
      %v215 = vmul.f32 %v207, %v213
      %v216 = vmul.f32 %v208, %v213
      %v217 = vld [vmem:[%s2] sm:$0xff]
      %219 = vset.pattern.permute.xlu0 0
      %220 = vperm.xlu0 %219, %v217
      %v221 = vpop.permute.xlu0 %220
      %v223 = vadd.f32 %v215, %v221
      %v224 = vadd.f32 %v216, %v221
      %v225 = vmax.f32 %v223, 0.0
      %v226 = vmax.f32 %v224, 0.0
      %227 = vst [vmem:[%s206] sm:$0xff] %v225
      %228 = vst [vmem:[%s206 + $0x8] sm:$0xff] %v226
      %p229 = scmp.lt.s32.totalorder %s18, 1
      %s230 = scalar_select %p229, %s18, 1
      %p231 = scmp.lt.s32.totalorder %s19, 15
      %s232 = scalar_select %p231, %s19, 15
      %s233 = smul.addr %s232, 2
      %s234 = smul.addr %s230, 32
      %s235 = sadd.s32 %s233, %s234
      %s236 = smul.addr %s235, 8
      %s237 = scalar_lea.vmem %s3, %s236
      // Predicated region
      $region33: #{basic_conv3d.3} parent=31 // pred_check
        %p238 = pneg %p116
      $region34: #{basic_conv3d.3} parent=31 // pred_check_branch
        %240 = sbr.rel (%p238) target = $region36
      $region35: #{basic_conv3d.3} parent=31 // pred_region
        _
      $region36: #{basic_conv3d.3} parent=31 // pred_fallthru
        _
    $region32: #{basic_conv3d.3} parent=5 // pred_fallthru
      _
    %p241 = scmp.le.s32.totalorder 2, %s9
    // Predicated region
    $region37: #{basic_conv3d.3} parent=5 // pred_check
      %p242 = pneg %p241
    $region38: #{basic_conv3d.3} parent=5 // pred_check_branch
      %244 = sbr.rel (%p242) target = $region40
    $region39: #{basic_conv3d.3} parent=5 // pred_region
      %s245 = ssub.s32 %s9, 2
      // Predicated region
      $region41: #{basic_conv3d.3} parent=39 // pred_check
        %p246 = pneg %p122
      $region42: #{basic_conv3d.3} parent=39 // pred_check_branch
        %248 = sbr.rel (%p246) target = $region44
      $region43: #{basic_conv3d.3} parent=39 // pred_region
        %p249 = scmp.lt.s32.totalorder %s20, 1
        %s250 = scalar_select %p249, %s20, 1
        %p251 = scmp.lt.s32.totalorder %s21, 15
        %s252 = scalar_select %p251, %s21, 15
        %s253 = smul.addr %s252, 2
        %s254 = smul.addr %s250, 32
        %s255 = sadd.s32 %s253, %s254
        %s256 = smul.addr %s255, 8
        %s257 = scalar_lea.vmem %s3, %s256
      $region44: #{basic_conv3d.3} parent=39 // pred_fallthru
        _
    $region40: #{basic_conv3d.3} parent=5 // pred_fallthru
      _
  $region6: #{basic_conv3d.3} parent=0 // loop_footer
    %s13 = sadd.s32 1, %s9
  $region7: #{basic_conv3d.3} parent=0 // loop_footer_branch
    %8 = sbr.rel target = $region3
  $region8: #{basic_conv3d.3} parent=0 // loop_exit
    _

// kernel: basic_conv3d.2
$region0: #{basic_conv3d.2}
  #allocation0 [shape = 'u32[]', space=smem, size = 0x4, offset = 0x4, fixed_abs, tag = 'smem constant byte address 0x4 - core index']
  #allocation1 [shape = 'u32[72,128]{1,0:T(1,128)}', space=vmem, size = 0x9000, scoped, tag = 'internal scratch']
  %s0 = inlined_call_operand.vmem [shape: bf16[2,18,18,18,4], index: 0, kind: input, shape index: {}]
  %s1 = inlined_call_operand.vmem [shape: bf16[3,9,8,4], index: 1, kind: input, shape index: {}]
  %s2 = inlined_call_operand.vmem [shape: f32[2,16,8,256], index: 2, kind: output, shape index: {0}]
  %s3 = inlined_call_operand.vmem [shape: f32[2,16,8,2], index: 3, kind: output, shape index: {1}]
  %4 = xla_tuple %s2, %s3
  %s5 = sld [smem:[#allocation0]]
  $region57: #{basic_conv3d.2} parent=0
    _
  %s7 = ssub.s32 1, %s5
  %s8 = scalar_select 0, %s7, %s5
  loop: start=0, step=1, limit=98
  $region2: #{basic_conv3d.2} parent=0 // loop_pre_header
    _
  $region3: #{basic_conv3d.2} parent=0 // loop_header
    %s10 = sphi 0, %s14
    %p11 = scmp.ge.s32.totalorder %s10, 98
    %s17 = sphi 0, %s36
    %s18 = sphi 0, %s32
    %s19 = sphi 0, %s28
    %s20 = sphi 0, %s17
    %s21 = sphi 0, %s18
    %s22 = sphi 0, %s19
    %s23 = sphi 0, %s20
    %s24 = sphi 0, %s21
    %s25 = sphi 0, %s22
    %s43 = sphi 0, %s45
    %s46 = sphi 0, %s43
    %s47 = sphi 0, %s46
    %s63 = sphi 0, %s47
    %s69 = sphi 0, %s71
    %s72 = sphi 0, %s69
    %s73 = sphi 0, %s72
    %s89 = sphi 0, %s73
    %s97 = sphi 0, %s99
    %s100 = sphi 0, %s97
    %s101 = sphi 0, %s100
    %s117 = sphi 0, %s101
    %s125 = sphi 0, %s127
    %s128 = sphi 0, %s125
    %s129 = sphi 0, %s128
    %s145 = sphi 0, %s129
  $region4: #{basic_conv3d.2} parent=0 // loop_header_branch
    %13 = sbr.rel (%p11) target = $region8
  $region5: #{basic_conv3d.2} parent=0 // loop_body
    %s15 = ssub.s32 %s10, 1
    %s16 = ssub.s32 %s10, 2
    %s26 = sadd.s32 1, %s19
    %p27 = scmp.ge.s32.totalorder %s26, 3
    %s28 = scalar_select %p27, 0, %s26
    %s29 = sadd.s32 1, %s18
    %s30 = scalar_select %p27, %s29, %s18
    %p31 = scmp.ge.s32.totalorder %s30, 16
    %s32 = scalar_select %p31, 0, %s30
    %s33 = sadd.s32 1, %s17
    %s34 = scalar_select %p31, %s33, %s17
    %p35 = scmp.ge.s32.totalorder %s34, 2
    %s36 = scalar_select %p35, 0, %s34
    %s37 = sadd.s32 %s18, %s19
    %s38 = sadd.s32 %s32, %s28
    %s39 = ssub.s32 %s17, %s36
    %s40 = ssub.s32 %s37, %s38
    %s41 = sor.u32 %s39, %s40
    %p42 = scmp.eq.s32.totalorder %s41, 0
    %s44 = sadd.s32 %s43, 1
    %s45 = scalar_select %p42, %s43, %s44
    %p48 = pneg %p42
    %p49 = scmp.eq.s32.totalorder %s10, 95
    %p50 = por %p48, %p49
    %p51 = scmp.ne.s32.totalorder %s43, %s46
    %p52 = scmp.eq.s32.totalorder %s10, 0
    %p53 = por %p51, %p52
    %p54 = scmp.ne.s32.totalorder %s43, %s46
    %p55 = scmp.eq.s32.totalorder %s15, 95
    %p56 = por %p54, %p55
    %p57 = scmp.ne.s32.totalorder %s46, %s47
    %p58 = scmp.eq.s32.totalorder %s15, 0
    %p59 = por %p57, %p58
    %p60 = scmp.ne.s32.totalorder %s46, %s47
    %p61 = scmp.eq.s32.totalorder %s16, 95
    %p62 = por %p60, %p61
    %p64 = scmp.ne.s32.totalorder %s47, %s63
    %p65 = scmp.eq.s32.totalorder %s16, 0
    %p66 = por %p64, %p65
    %s67 = ssub.s32 %s19, %s28
    %p68 = scmp.eq.s32.totalorder %s67, 0
    %s70 = sadd.s32 %s69, 1
    %s71 = scalar_select %p68, %s69, %s70
    %p74 = pneg %p68
    %p75 = scmp.eq.s32.totalorder %s10, 95
    %p76 = por %p74, %p75
    %p77 = scmp.ne.s32.totalorder %s69, %s72
    %p78 = scmp.eq.s32.totalorder %s10, 0
    %p79 = por %p77, %p78
    %p80 = scmp.ne.s32.totalorder %s69, %s72
    %p81 = scmp.eq.s32.totalorder %s15, 95
    %p82 = por %p80, %p81
    %p83 = scmp.ne.s32.totalorder %s72, %s73
    %p84 = scmp.eq.s32.totalorder %s15, 0
    %p85 = por %p83, %p84
    %p86 = scmp.ne.s32.totalorder %s72, %s73
    %p87 = scmp.eq.s32.totalorder %s16, 95
    %p88 = por %p86, %p87
    %p90 = scmp.ne.s32.totalorder %s73, %s89
    %p91 = scmp.eq.s32.totalorder %s16, 0
    %p92 = por %p90, %p91
    %s93 = ssub.s32 %s17, %s36
    %s94 = ssub.s32 %s18, %s32
    %s95 = sor.u32 %s93, %s94
    %p96 = scmp.eq.s32.totalorder %s95, 0
    %s98 = sadd.s32 %s97, 1
    %s99 = scalar_select %p96, %s97, %s98
    %p102 = pneg %p96
    %p103 = scmp.eq.s32.totalorder %s10, 95
    %p104 = por %p102, %p103
    %p105 = scmp.ne.s32.totalorder %s97, %s100
    %p106 = scmp.eq.s32.totalorder %s10, 0
    %p107 = por %p105, %p106
    %p108 = scmp.ne.s32.totalorder %s97, %s100
    %p109 = scmp.eq.s32.totalorder %s15, 95
    %p110 = por %p108, %p109
    %p111 = scmp.ne.s32.totalorder %s100, %s101
    %p112 = scmp.eq.s32.totalorder %s15, 0
    %p113 = por %p111, %p112
    %p114 = scmp.ne.s32.totalorder %s100, %s101
    %p115 = scmp.eq.s32.totalorder %s16, 95
    %p116 = por %p114, %p115
    %p118 = scmp.ne.s32.totalorder %s101, %s117
    %p119 = scmp.eq.s32.totalorder %s16, 0
    %p120 = por %p118, %p119
    %s121 = ssub.s32 %s17, %s36
    %s122 = ssub.s32 %s18, %s32
    %s123 = sor.u32 %s121, %s122
    %p124 = scmp.eq.s32.totalorder %s123, 0
    %s126 = sadd.s32 %s125, 1
    %s127 = scalar_select %p124, %s125, %s126
    %p130 = pneg %p124
    %p131 = scmp.eq.s32.totalorder %s10, 95
    %p132 = por %p130, %p131
    %p133 = scmp.ne.s32.totalorder %s125, %s128
    %p134 = scmp.eq.s32.totalorder %s10, 0
    %p135 = por %p133, %p134
    %p136 = scmp.ne.s32.totalorder %s125, %s128
    %p137 = scmp.eq.s32.totalorder %s15, 95
    %p138 = por %p136, %p137
    %p139 = scmp.ne.s32.totalorder %s128, %s129
    %p140 = scmp.eq.s32.totalorder %s15, 0
    %p141 = por %p139, %p140
    %p142 = scmp.ne.s32.totalorder %s128, %s129
    %p143 = scmp.eq.s32.totalorder %s16, 95
    %p144 = por %p142, %p143
    %p146 = scmp.ne.s32.totalorder %s129, %s145
    %p147 = scmp.eq.s32.totalorder %s16, 0
    %p148 = por %p146, %p147
    %p149 = scmp.le.s32.totalorder 1, %s10
    %p150 = scmp.lt.s32.totalorder %s10, 97
    %p151 = pnand %p149, %p150
    %p152 = pneg %p151
    // Predicated region
    $region9: #{basic_conv3d.2} parent=5 // pred_check
      _
    $region10: #{basic_conv3d.2} parent=5 // pred_check_branch
      %154 = sbr.rel (%p151) target = $region12
    $region11: #{basic_conv3d.2} parent=5 // pred_region
      %s155 = ssub.s32 %s10, 1
    $region12: #{basic_conv3d.2} parent=5 // pred_fallthru
      _
    %p156 = scmp.lt.s32.totalorder %s10, 96
    // Predicated region
    $region13: #{basic_conv3d.2} parent=5 // pred_check
      %p157 = pneg %p156
    $region14: #{basic_conv3d.2} parent=5 // pred_check_branch
      %159 = sbr.rel (%p157) target = $region16
    $region15: #{basic_conv3d.2} parent=5 // pred_region
      // Predicated region
      $region17: #{basic_conv3d.2} parent=15 // pred_check
        %p160 = pneg %p53
      $region18: #{basic_conv3d.2} parent=15 // pred_check_branch
        %162 = sbr.rel (%p160) target = $region20
      $region19: #{basic_conv3d.2} parent=15 // pred_region
        %s163 = sadd.s32 %s18, %s19
        %p164 = scmp.lt.s32.totalorder %s17, 1
        %s165 = scalar_select %p164, %s17, 1
        %p166 = scmp.lt.s32.totalorder %s163, 17
        %s167 = scalar_select %p166, %s163, 17
        %s168 = smul.addr %s167, 54
        %s169 = smul.addr %s165, 972
        %s170 = sadd.s32 %s168, %s169
        %s171 = smul.addr %s170, 4
        %s172 = scalar_lea.vmem %s0, %s171
        %s173 = sadd.s32 %s18, %s19
      $region20: #{basic_conv3d.2} parent=15 // pred_fallthru
        _
      // Predicated region
      $region21: #{basic_conv3d.2} parent=15 // pred_check
        %p174 = pneg %p79
      $region22: #{basic_conv3d.2} parent=15 // pred_check_branch
        %176 = sbr.rel (%p174) target = $region24
      $region23: #{basic_conv3d.2} parent=15 // pred_region
        %p177 = scmp.lt.s32.totalorder %s19, 2
        %s178 = scalar_select %p177, %s19, 2
        %s179 = smul.addr %s178, 9
        %s180 = smul.addr %s179, 4
        %s181 = scalar_lea.vmem %s1, %s180
      $region24: #{basic_conv3d.2} parent=15 // pred_fallthru
        _
    $region16: #{basic_conv3d.2} parent=5 // pred_fallthru
      _
    %p182 = scmp.le.s32.totalorder 1, %s10
    %p183 = scmp.lt.s32.totalorder %s10, 97
    %p184 = pnand %p182, %p183
    %p185 = pneg %p184
    // Predicated region
    $region25: #{basic_conv3d.2} parent=5 // pred_check
      _
    $region26: #{basic_conv3d.2} parent=5 // pred_check_branch
      %187 = sbr.rel (%p184) target = $region28
    $region27: #{basic_conv3d.2} parent=5 // pred_region
      %s188 = ssub.s32 %s10, 1
      %s189 = sadd.s32 %s21, %s22
      %p190 = scmp.lt.s32.totalorder %s20, 1
      %s191 = scalar_select %p190, %s20, 1
      %p192 = scmp.lt.s32.totalorder %s189, 17
      %s193 = scalar_select %p192, %s189, 17
      %s194 = smul.addr %s193, 54
      %s195 = smul.addr %s191, 972
      %s196 = sadd.s32 %s194, %s195
      %s197 = smul.addr %s196, 4
      %s198 = scalar_lea.vmem %s0, %s197
      %p199 = pneg %p59
      %p200 = pneg %p56
      %p201 = scmp.lt.s32.totalorder %s22, 2
      %s202 = scalar_select %p201, %s22, 2
      %s203 = smul.addr %s202, 9
      %s204 = smul.addr %s203, 4
      %s205 = scalar_lea.vmem %s1, %s204
      %p206 = pneg %p85
      %p207 = pneg %p82
      %p208 = pneg %p113
      %p209 = pneg %p110
      %p210 = scmp.lt.s32.totalorder %s20, 1
      %s211 = scalar_select %p210, %s20, 1
      %p212 = scmp.lt.s32.totalorder %s21, 15
      %s213 = scalar_select %p212, %s21, 15
      %s214 = smul.addr %s213, 2
      %s215 = smul.addr %s211, 32
      %s216 = sadd.s32 %s214, %s215
      %s217 = smul.addr %s216, 8
      %s218 = scalar_lea.vmem %s2, %s217
      %p219 = pneg %p141
      %p220 = pneg %p138
      %p221 = scmp.lt.s32.totalorder %s20, 1
      %s222 = scalar_select %p221, %s20, 1
      %p223 = scmp.lt.s32.totalorder %s21, 15
      %s224 = scalar_select %p223, %s21, 15
      %s225 = smul.addr %s222, 16
      %s226 = sadd.s32 %s224, %s225
      %s227 = smul.addr %s226, 8
      %s228 = scalar_lea.vmem %s3, %s227
      %s229 = sadd.s32 %s21, %s22
      %p230 = scmp.lt.s32.totalorder %s20, 1
      %s231 = scalar_select %p230, %s20, 1
      %p232 = scmp.lt.s32.totalorder %s229, 17
      %s233 = scalar_select %p232, %s229, 17
      %s234 = smul.addr %s233, 54
      %s235 = smul.addr %s231, 972
      %s236 = sadd.s32 %s234, %s235
      %s237 = smul.addr %s236, 4
      %s238 = scalar_lea.vmem %s0, %s237
      %s239 = sadd.s32 %s21, %s22
      %p240 = scmp.lt.s32.totalorder %s22, 2
      %s241 = scalar_select %p240, %s22, 2
      %s242 = smul.addr %s241, 9
      %s243 = smul.addr %s242, 4
      %s244 = scalar_lea.vmem %s1, %s243
      %p245 = scmp.lt.s32.totalorder %s20, 1
      %s246 = scalar_select %p245, %s20, 1
      %p247 = scmp.lt.s32.totalorder %s21, 15
      %s248 = scalar_select %p247, %s21, 15
      %s249 = smul.addr %s248, 2
      %s250 = smul.addr %s246, 32
      %s251 = sadd.s32 %s249, %s250
      %s252 = smul.addr %s251, 8
      %s253 = scalar_lea.vmem %s2, %s252
      %p254 = scmp.lt.s32.totalorder %s20, 1
      %s255 = scalar_select %p254, %s20, 1
      %p256 = scmp.lt.s32.totalorder %s21, 15
      %s257 = scalar_select %p256, %s21, 15
      %s258 = smul.addr %s255, 16
      %s259 = sadd.s32 %s257, %s258
      %s260 = smul.addr %s259, 8
      %s261 = scalar_lea.vmem %s3, %s260
      %p262 = scmp.eq.s32.totalorder %s22, 0
      // Predicated region
      $region29: #{basic_conv3d.2} parent=27 // pred_check
        %p263 = pneg %p262
      $region30: #{basic_conv3d.2} parent=27 // pred_check_branch
        %265 = sbr.rel (%p263) target = $region32
      $region31: #{basic_conv3d.2} parent=27 // pred_region
        %266 = vst [vmem:[%s253] sm:$0xff] 0.0
        %267 = vst [vmem:[%s253 + $0x8] sm:$0xff] 0.0
      $region32: #{basic_conv3d.2} parent=27 // pred_fallthru
        _
      %v268 = vld [vmem:[%s238] sm:$0xf]
      %v269 = vld [vmem:[%s238 + $0x4] sm:$0xf]
      %v270 = vld [vmem:[%s238 + $0x8] sm:$0x1]
      %v271 = vld [vmem:[%s238 + $0xc] sm:$0xf]
      %v272 = vld [vmem:[%s238 + $0x10] sm:$0xf]
      %v273 = vld [vmem:[%s238 + $0x14] sm:$0x1]
      %v274 = vld [vmem:[%s238 + $0x18] sm:$0xf]
      %v275 = vld [vmem:[%s238 + $0x1c] sm:$0xf]
      %v276 = vld [vmem:[%s238 + $0x20] sm:$0x1]
      %v277 = vld [vmem:[%s238 + $0x24] sm:$0xf]
      %v278 = vld [vmem:[%s238 + $0x28] sm:$0xf]
      %v279 = vld [vmem:[%s238 + $0x2c] sm:$0x1]
      %v280 = vld [vmem:[%s238 + $0x30] sm:$0xf]
      %v281 = vld [vmem:[%s238 + $0x34] sm:$0xf]
      %v282 = vld [vmem:[%s238 + $0x38] sm:$0x1]
      %v283 = vld [vmem:[%s238 + $0x3c] sm:$0xf]
      %v284 = vld [vmem:[%s238 + $0x40] sm:$0xf]
      %v285 = vld [vmem:[%s238 + $0x44] sm:$0x1]
      %v286 = vld [vmem:[%s238 + $0x48] sm:$0xf]
      %v287 = vld [vmem:[%s238 + $0x4c] sm:$0xf]
      %v288 = vld [vmem:[%s238 + $0x50] sm:$0x1]
      %v289 = vld [vmem:[%s238 + $0x54] sm:$0xf]
      %v290 = vld [vmem:[%s238 + $0x58] sm:$0xf]
      %v291 = vld [vmem:[%s238 + $0x5c] sm:$0x1]
      %v292 = vld [vmem:[%s238 + $0x60] sm:$0xf]
      %v293 = vld [vmem:[%s238 + $0x64] sm:$0xf]
      %v294 = vld [vmem:[%s238 + $0x68] sm:$0x1]
      %v295 = vld [vmem:[%s238 + $0x6c] sm:$0xf]
      %v296 = vld [vmem:[%s238 + $0x70] sm:$0xf]
      %v297 = vld [vmem:[%s238 + $0x74] sm:$0x1]
      %v298 = vld [vmem:[%s238 + $0x78] sm:$0xf]
      %v299 = vld [vmem:[%s238 + $0x7c] sm:$0xf]
      %v300 = vld [vmem:[%s238 + $0x80] sm:$0x1]
      %v301 = vld [vmem:[%s238 + $0x84] sm:$0xf]
      %v302 = vld [vmem:[%s238 + $0x88] sm:$0xf]
      %v303 = vld [vmem:[%s238 + $0x8c] sm:$0x1]
      %v304 = vld [vmem:[%s238 + $0x90] sm:$0xf]
      %v305 = vld [vmem:[%s238 + $0x94] sm:$0xf]
      %v306 = vld [vmem:[%s238 + $0x98] sm:$0x1]
      %v307 = vld [vmem:[%s238 + $0x9c] sm:$0xf]
      %v308 = vld [vmem:[%s238 + $0xa0] sm:$0xf]
      %v309 = vld [vmem:[%s238 + $0xa4] sm:$0x1]
      %v310 = vld [vmem:[%s238 + $0xa8] sm:$0xf]
      %v311 = vld [vmem:[%s238 + $0xac] sm:$0xf]
      %v312 = vld [vmem:[%s238 + $0xb0] sm:$0x1]
      %v313 = vld [vmem:[%s238 + $0xb4] sm:$0xf]
      %v314 = vld [vmem:[%s238 + $0xb8] sm:$0xf]
      %v315 = vld [vmem:[%s238 + $0xbc] sm:$0x1]
      %v316 = vld [vmem:[%s238 + $0xc0] sm:$0xf]
      %v317 = vld [vmem:[%s238 + $0xc4] sm:$0xf]
      %v318 = vld [vmem:[%s238 + $0xc8] sm:$0x1]
      %v319 = vld [vmem:[%s238 + $0xcc] sm:$0xf]
      %v320 = vld [vmem:[%s238 + $0xd0] sm:$0xf]
      %v321 = vld [vmem:[%s238 + $0xd4] sm:$0x1]
      %v322 = vld [vmem:[%s244] sm:$0xf]
      %vm323 = vsmask.f32 3328
      %vm324 = vsmask.f32 7440
      %vm325 = vmor %vm323, %vm324
      %v327 = vshrl.u32 %v268, 16
      %v329 = vrot.slane %v327, 4
      %v330 = vshll.u32 %v268, 16
      %v332 = vrot.slane %v330, 5
      %v333 = vor.u32 %v329, %v332
      %v334 = vrot.slane %v333, 4
      %v336 = vshll.u32 %v269, 16
      %v338 = vrot.slane %v336, 5
      %v339 = vsel %vm325, %v334, %v338
      %v340 = vshrl.u32 %v269, 16
      %v342 = vrot.slane %v340, 4
      %v343 = vor.u32 %v342, %v338
      %v344 = vrot.slane %v343, 4
      %v346 = vshll.u32 %v270, 16
      %v348 = vrot.slane %v346, 5
      %v349 = vsel %vm325, %v344, %v348
      %v351 = vshrl.u32 %v271, 16
      %v353 = vrot.slane %v351, 4
      %v354 = vshll.u32 %v271, 16
      %v356 = vrot.slane %v354, 5
      %v357 = vor.u32 %v353, %v356
      %v358 = vrot.slane %v357, 4
      %v360 = vshll.u32 %v272, 16
      %v362 = vrot.slane %v360, 5
      %v363 = vsel %vm325, %v358, %v362
      %v364 = vshrl.u32 %v272, 16
      %v366 = vrot.slane %v364, 4
      %v367 = vor.u32 %v366, %v362
      %v368 = vrot.slane %v367, 4
      %v370 = vshll.u32 %v273, 16
      %v372 = vrot.slane %v370, 5
      %v373 = vsel %vm325, %v368, %v372
      %v375 = vshrl.u32 %v274, 16
      %v377 = vrot.slane %v375, 4
      %v378 = vshll.u32 %v274, 16
      %v380 = vrot.slane %v378, 5
      %v381 = vor.u32 %v377, %v380
      %v382 = vrot.slane %v381, 4
      %v384 = vshll.u32 %v275, 16
      %v386 = vrot.slane %v384, 5
      %v387 = vsel %vm325, %v382, %v386
      %v388 = vshrl.u32 %v275, 16
      %v390 = vrot.slane %v388, 4
      %v391 = vor.u32 %v390, %v386
      %v392 = vrot.slane %v391, 4
      %v394 = vshll.u32 %v276, 16
      %v396 = vrot.slane %v394, 5
      %v397 = vsel %vm325, %v392, %v396
      %v399 = vshrl.u32 %v277, 16
      %v401 = vrot.slane %v399, 4
      %v402 = vshll.u32 %v277, 16
      %v404 = vrot.slane %v402, 5
      %v405 = vor.u32 %v401, %v404
      %v406 = vrot.slane %v405, 4
      %v408 = vshll.u32 %v278, 16
      %v410 = vrot.slane %v408, 5
      %v411 = vsel %vm325, %v406, %v410
      %v412 = vshrl.u32 %v278, 16
      %v414 = vrot.slane %v412, 4
      %v415 = vor.u32 %v414, %v410
      %v416 = vrot.slane %v415, 4
      %v418 = vshll.u32 %v279, 16
      %v420 = vrot.slane %v418, 5
      %v421 = vsel %vm325, %v416, %v420
      %v423 = vshrl.u32 %v280, 16
      %v425 = vrot.slane %v423, 4
      %v426 = vshll.u32 %v280, 16
      %v428 = vrot.slane %v426, 5
      %v429 = vor.u32 %v425, %v428
      %v430 = vrot.slane %v429, 4
      %v432 = vshll.u32 %v281, 16
      %v434 = vrot.slane %v432, 5
      %v435 = vsel %vm325, %v430, %v434
      %v436 = vshrl.u32 %v281, 16
      %v438 = vrot.slane %v436, 4
      %v439 = vor.u32 %v438, %v434
      %v440 = vrot.slane %v439, 4
      %v442 = vshll.u32 %v282, 16
      %v444 = vrot.slane %v442, 5
      %v445 = vsel %vm325, %v440, %v444
      %v447 = vshrl.u32 %v283, 16
      %v449 = vrot.slane %v447, 4
      %v450 = vshll.u32 %v283, 16
      %v452 = vrot.slane %v450, 5
      %v453 = vor.u32 %v449, %v452
      %v454 = vrot.slane %v453, 4
      %v456 = vshll.u32 %v284, 16
      %v458 = vrot.slane %v456, 5
      %v459 = vsel %vm325, %v454, %v458
      %v460 = vshrl.u32 %v284, 16
      %v462 = vrot.slane %v460, 4
      %v463 = vor.u32 %v462, %v458
      %v464 = vrot.slane %v463, 4
      %v466 = vshll.u32 %v285, 16
      %v468 = vrot.slane %v466, 5
      %v469 = vsel %vm325, %v464, %v468
      %v471 = vshrl.u32 %v286, 16
      %v473 = vrot.slane %v471, 4
      %v474 = vshll.u32 %v286, 16
      %v476 = vrot.slane %v474, 5
      %v477 = vor.u32 %v473, %v476
      %v478 = vrot.slane %v477, 4
      %v480 = vshll.u32 %v287, 16
      %v482 = vrot.slane %v480, 5
      %v483 = vsel %vm325, %v478, %v482
      %v484 = vshrl.u32 %v287, 16
      %v486 = vrot.slane %v484, 4
      %v487 = vor.u32 %v486, %v482
      %v488 = vrot.slane %v487, 4
      %v490 = vshll.u32 %v288, 16
      %v492 = vrot.slane %v490, 5
      %v493 = vsel %vm325, %v488, %v492
      %v495 = vshrl.u32 %v289, 16
      %v497 = vrot.slane %v495, 4
      %v498 = vshll.u32 %v289, 16
      %v500 = vrot.slane %v498, 5
      %v501 = vor.u32 %v497, %v500
      %v502 = vrot.slane %v501, 4
      %v504 = vshll.u32 %v290, 16
      %v506 = vrot.slane %v504, 5
      %v507 = vsel %vm325, %v502, %v506
      %v508 = vshrl.u32 %v290, 16
      %v510 = vrot.slane %v508, 4
      %v511 = vor.u32 %v510, %v506
      %v512 = vrot.slane %v511, 4
      %v514 = vshll.u32 %v291, 16
      %v516 = vrot.slane %v514, 5
      %v517 = vsel %vm325, %v512, %v516
      %v519 = vshrl.u32 %v292, 16
      %v521 = vrot.slane %v519, 4
      %v522 = vshll.u32 %v292, 16
      %v524 = vrot.slane %v522, 5
      %v525 = vor.u32 %v521, %v524
      %v526 = vrot.slane %v525, 4
      %v528 = vshll.u32 %v293, 16
      %v530 = vrot.slane %v528, 5
      %v531 = vsel %vm325, %v526, %v530
      %v532 = vshrl.u32 %v293, 16
      %v534 = vrot.slane %v532, 4
      %v535 = vor.u32 %v534, %v530
      %v536 = vrot.slane %v535, 4
      %v538 = vshll.u32 %v294, 16
      %v540 = vrot.slane %v538, 5
      %v541 = vsel %vm325, %v536, %v540
      %v543 = vshrl.u32 %v295, 16
      %v545 = vrot.slane %v543, 4
      %v546 = vshll.u32 %v295, 16
      %v548 = vrot.slane %v546, 5
      %v549 = vor.u32 %v545, %v548
      %v550 = vrot.slane %v549, 4
      %v552 = vshll.u32 %v296, 16
      %v554 = vrot.slane %v552, 5
      %v555 = vsel %vm325, %v550, %v554
      %v556 = vshrl.u32 %v296, 16
      %v558 = vrot.slane %v556, 4
      %v559 = vor.u32 %v558, %v554
      %v560 = vrot.slane %v559, 4
      %v562 = vshll.u32 %v297, 16
      %v564 = vrot.slane %v562, 5
      %v565 = vsel %vm325, %v560, %v564
      %v567 = vshrl.u32 %v298, 16
      %v569 = vrot.slane %v567, 4
      %v570 = vshll.u32 %v298, 16
      %v572 = vrot.slane %v570, 5
      %v573 = vor.u32 %v569, %v572
      %v574 = vrot.slane %v573, 4
      %v576 = vshll.u32 %v299, 16
      %v578 = vrot.slane %v576, 5
      %v579 = vsel %vm325, %v574, %v578
      %v580 = vshrl.u32 %v299, 16
      %v582 = vrot.slane %v580, 4
      %v583 = vor.u32 %v582, %v578
      %v584 = vrot.slane %v583, 4
      %v586 = vshll.u32 %v300, 16
      %v588 = vrot.slane %v586, 5
      %v589 = vsel %vm325, %v584, %v588
      %v591 = vshrl.u32 %v301, 16
      %v593 = vrot.slane %v591, 4
      %v594 = vshll.u32 %v301, 16
      %v596 = vrot.slane %v594, 5
      %v597 = vor.u32 %v593, %v596
      %v598 = vrot.slane %v597, 4
      %v600 = vshll.u32 %v302, 16
      %v602 = vrot.slane %v600, 5
      %v603 = vsel %vm325, %v598, %v602
      %v604 = vshrl.u32 %v302, 16
      %v606 = vrot.slane %v604, 4
      %v607 = vor.u32 %v606, %v602
      %v608 = vrot.slane %v607, 4
      %v610 = vshll.u32 %v303, 16
      %v612 = vrot.slane %v610, 5
      %v613 = vsel %vm325, %v608, %v612
      %v615 = vshrl.u32 %v304, 16
      %v617 = vrot.slane %v615, 4
      %v618 = vshll.u32 %v304, 16
      %v620 = vrot.slane %v618, 5
      %v621 = vor.u32 %v617, %v620
      %v622 = vrot.slane %v621, 4
      %v624 = vshll.u32 %v305, 16
      %v626 = vrot.slane %v624, 5
      %v627 = vsel %vm325, %v622, %v626
      %v628 = vshrl.u32 %v305, 16
      %v630 = vrot.slane %v628, 4
      %v631 = vor.u32 %v630, %v626
      %v632 = vrot.slane %v631, 4
      %v634 = vshll.u32 %v306, 16
      %v636 = vrot.slane %v634, 5
      %v637 = vsel %vm325, %v632, %v636
      %v639 = vshrl.u32 %v307, 16
      %v641 = vrot.slane %v639, 4
      %v642 = vshll.u32 %v307, 16
      %v644 = vrot.slane %v642, 5
      %v645 = vor.u32 %v641, %v644
      %v646 = vrot.slane %v645, 4
      %v648 = vshll.u32 %v308, 16
      %v650 = vrot.slane %v648, 5
      %v651 = vsel %vm325, %v646, %v650
      %v652 = vshrl.u32 %v308, 16
      %v654 = vrot.slane %v652, 4
      %v655 = vor.u32 %v654, %v650
      %v656 = vrot.slane %v655, 4
      %v658 = vshll.u32 %v309, 16
      %v660 = vrot.slane %v658, 5
      %v661 = vsel %vm325, %v656, %v660
      %v663 = vshrl.u32 %v310, 16
      %v665 = vrot.slane %v663, 4
      %v666 = vshll.u32 %v310, 16
      %v668 = vrot.slane %v666, 5
      %v669 = vor.u32 %v665, %v668
      %v670 = vrot.slane %v669, 4
      %v672 = vshll.u32 %v311, 16
      %v674 = vrot.slane %v672, 5
      %v675 = vsel %vm325, %v670, %v674
      %v676 = vshrl.u32 %v311, 16
      %v678 = vrot.slane %v676, 4
      %v679 = vor.u32 %v678, %v674
      %v680 = vrot.slane %v679, 4
      %v682 = vshll.u32 %v312, 16
      %v684 = vrot.slane %v682, 5
      %v685 = vsel %vm325, %v680, %v684
      %v687 = vshrl.u32 %v313, 16
      %v689 = vrot.slane %v687, 4
      %v690 = vshll.u32 %v313, 16
      %v692 = vrot.slane %v690, 5
      %v693 = vor.u32 %v689, %v692
      %v694 = vrot.slane %v693, 4
      %v696 = vshll.u32 %v314, 16
      %v698 = vrot.slane %v696, 5
      %v699 = vsel %vm325, %v694, %v698
      %v700 = vshrl.u32 %v314, 16
      %v702 = vrot.slane %v700, 4
      %v703 = vor.u32 %v702, %v698
      %v704 = vrot.slane %v703, 4
      %v706 = vshll.u32 %v315, 16
      %v708 = vrot.slane %v706, 5
      %v709 = vsel %vm325, %v704, %v708
      %s710 = scalar_lea.vmem %s244, 4
      %v711 = vld [vmem:[%s710] sm:$0xf]
      %v712 = vunpack.c.l.b16 %v339
      %v713 = vunpack.c.l.b16 %v349
      %v714 = vunpack.c.l.b16 %v363
      %v715 = vunpack.c.l.b16 %v373
      %v716 = vunpack.c.l.b16 %v387
      %v717 = vunpack.c.l.b16 %v397
      %v718 = vunpack.c.l.b16 %v411
      %v719 = vunpack.c.l.b16 %v421
      %v720 = vunpack.c.l.b16 %v435
      %v721 = vunpack.c.l.b16 %v445
      %v722 = vunpack.c.l.b16 %v459
      %v723 = vunpack.c.l.b16 %v469
      %v724 = vunpack.c.l.b16 %v483
      %v725 = vunpack.c.l.b16 %v493
      %v726 = vunpack.c.l.b16 %v507
      %v727 = vunpack.c.l.b16 %v517
      %v728 = vunpack.c.l.b16 %v531
      %v729 = vunpack.c.l.b16 %v541
      %v730 = vunpack.c.l.b16 %v555
      %v731 = vunpack.c.l.b16 %v565
      %v732 = vunpack.c.l.b16 %v579
      %v733 = vunpack.c.l.b16 %v589
      %v734 = vunpack.c.l.b16 %v603
      %v735 = vunpack.c.l.b16 %v613
      %v736 = vunpack.c.l.b16 %v627
      %v737 = vunpack.c.l.b16 %v637
      %v738 = vunpack.c.l.b16 %v651
      %v739 = vunpack.c.l.b16 %v661
      %v740 = vunpack.c.l.b16 %v675
      %v741 = vunpack.c.l.b16 %v685
      %v742 = vunpack.c.l.b16 %v699
      %v743 = vunpack.c.l.b16 %v709
      %v744 = vpack.c.b16 %v713, %v712
      %v745 = vpack.c.b16 %v715, %v714
      %v746 = vpack.c.b16 %v717, %v716
      %v747 = vpack.c.b16 %v719, %v718
      %v748 = vpack.c.b16 %v721, %v720
      %v749 = vpack.c.b16 %v723, %v722
      %v750 = vpack.c.b16 %v725, %v724
      %v751 = vpack.c.b16 %v727, %v726
      %v752 = vpack.c.b16 %v729, %v728
      %v753 = vpack.c.b16 %v731, %v730
      %v754 = vpack.c.b16 %v733, %v732
      %v755 = vpack.c.b16 %v735, %v734
      %v756 = vpack.c.b16 %v737, %v736
      %v757 = vpack.c.b16 %v739, %v738
      %v758 = vpack.c.b16 %v741, %v740
      %v759 = vpack.c.b16 %v743, %v742
      %vm760 = vcmask 31744
      %v762 = vsel %vm760, %v711, 0
      %v765 = vsel %vm760, %v744, 0
      %v768 = vsel %vm760, %v745, 0
      %v771 = vsel %vm760, %v746, 0
      %v774 = vsel %vm760, %v747, 0
      %v777 = vsel %vm760, %v748, 0
      %v780 = vsel %vm760, %v749, 0
      %v783 = vsel %vm760, %v750, 0
      %v786 = vsel %vm760, %v751, 0
      %v789 = vsel %vm760, %v752, 0
      %v792 = vsel %vm760, %v753, 0
      %v795 = vsel %vm760, %v754, 0
      %v798 = vsel %vm760, %v755, 0
      %v801 = vsel %vm760, %v756, 0
      %v804 = vsel %vm760, %v757, 0
      %v807 = vsel %vm760, %v758, 0
      %v810 = vsel %vm760, %v759, 0
      %812 = vmatpush.bf16.xpose.msra.mxu0 %v786
      %813 = vmatpush.bf16.xpose.msra.mxu0 %v783
      %814 = vmatpush.bf16.xpose.msra.mxu0 %v780
      %815 = vmatpush.bf16.xpose.msra.mxu0 %v777
      %816 = vmatpush.bf16.xpose.msra.mxu0 %v774
      %817 = vmatpush.bf16.xpose.msra.mxu0 %v771
      %818 = vmatpush.bf16.xpose.msra.mxu0 %v768
      %819 = vmatpush.bf16.xpose.msra.mxu0 %v765
      %820 = vmatmul.bf16.gmra.mxu0 %v762
      %v821 = vpop.f32.mrf.mxu0
      %v822 = vadd.f32 0.0, %v821
      %v823 = vpop.f32.mrf.mxu0
      %824 = vdwg.mxu0
      %825 = vmatpush.bf16.xpose.msra.mxu0 %v810
      %826 = vmatpush.bf16.xpose.msra.mxu0 %v807
      %827 = vmatpush.bf16.xpose.msra.mxu0 %v804
      %828 = vmatpush.bf16.xpose.msra.mxu0 %v801
      %829 = vmatpush.bf16.xpose.msra.mxu0 %v798
      %830 = vmatpush.bf16.xpose.msra.mxu0 %v795
      %831 = vmatpush.bf16.xpose.msra.mxu0 %v792
      %832 = vmatpush.bf16.xpose.msra.mxu0 %v789
      %833 = vmatmul.bf16.gmra.mxu0 %v762
      %v834 = vpop.f32.mrf.mxu0
      %v835 = vadd.f32 0.0, %v834
      %v836 = vpop.f32.mrf.mxu0
      %837 = vdwg.mxu0
      %v870 = vunpack.c.l.b16 %v268
      %v871 = vunpack.c.l.b16 %v269
      %v872 = vunpack.c.l.b16 %v271
      %v873 = vunpack.c.l.b16 %v272
      %v874 = vunpack.c.l.b16 %v274
      %v875 = vunpack.c.l.b16 %v275
      %v876 = vunpack.c.l.b16 %v277
      %v877 = vunpack.c.l.b16 %v278
      %v878 = vunpack.c.l.b16 %v280
      %v879 = vunpack.c.l.b16 %v281
      %v880 = vunpack.c.l.b16 %v283
      %v881 = vunpack.c.l.b16 %v284
      %v882 = vunpack.c.l.b16 %v286
      %v883 = vunpack.c.l.b16 %v287
      %v884 = vunpack.c.l.b16 %v289
      %v885 = vunpack.c.l.b16 %v290
      %v886 = vunpack.c.l.b16 %v292
      %v887 = vunpack.c.l.b16 %v293
      %v888 = vunpack.c.l.b16 %v295
      %v889 = vunpack.c.l.b16 %v296
      %v890 = vunpack.c.l.b16 %v298
      %v891 = vunpack.c.l.b16 %v299
      %v892 = vunpack.c.l.b16 %v301
      %v893 = vunpack.c.l.b16 %v302
      %v894 = vunpack.c.l.b16 %v304
      %v895 = vunpack.c.l.b16 %v305
      %v896 = vunpack.c.l.b16 %v307
      %v897 = vunpack.c.l.b16 %v308
      %v898 = vunpack.c.l.b16 %v310
      %v899 = vunpack.c.l.b16 %v311
      %v900 = vunpack.c.l.b16 %v313
      %v901 = vunpack.c.l.b16 %v314
      %v902 = vpack.c.b16 %v871, %v870
      %v903 = vpack.c.b16 %v873, %v872
      %v904 = vpack.c.b16 %v875, %v874
      %v905 = vpack.c.b16 %v877, %v876
      %v906 = vpack.c.b16 %v879, %v878
      %v907 = vpack.c.b16 %v881, %v880
      %v908 = vpack.c.b16 %v883, %v882
      %v909 = vpack.c.b16 %v885, %v884
      %v910 = vpack.c.b16 %v887, %v886
      %v911 = vpack.c.b16 %v889, %v888
      %v912 = vpack.c.b16 %v891, %v890
      %v913 = vpack.c.b16 %v893, %v892
      %v914 = vpack.c.b16 %v895, %v894
      %v915 = vpack.c.b16 %v897, %v896
      %v916 = vpack.c.b16 %v899, %v898
      %v917 = vpack.c.b16 %v901, %v900
      %v919 = vsel %vm760, %v322, 0
      %v922 = vsel %vm760, %v902, 0
      %v925 = vsel %vm760, %v903, 0
      %v928 = vsel %vm760, %v904, 0
      %v931 = vsel %vm760, %v905, 0
      %v934 = vsel %vm760, %v906, 0
      %v937 = vsel %vm760, %v907, 0
      %v940 = vsel %vm760, %v908, 0
      %v943 = vsel %vm760, %v909, 0
      %v946 = vsel %vm760, %v910, 0
      %v949 = vsel %vm760, %v911, 0
      %v952 = vsel %vm760, %v912, 0
      %v955 = vsel %vm760, %v913, 0
      %v958 = vsel %vm760, %v914, 0
      %v961 = vsel %vm760, %v915, 0
      %v964 = vsel %vm760, %v916, 0
      %v967 = vsel %vm760, %v917, 0
      %969 = vmatpush.bf16.xpose.msra.mxu0 %v943
      %970 = vmatpush.bf16.xpose.msra.mxu0 %v940
      %971 = vmatpush.bf16.xpose.msra.mxu0 %v937
      %972 = vmatpush.bf16.xpose.msra.mxu0 %v934
      %973 = vmatpush.bf16.xpose.msra.mxu0 %v931
      %974 = vmatpush.bf16.xpose.msra.mxu0 %v928
      %975 = vmatpush.bf16.xpose.msra.mxu0 %v925
      %976 = vmatpush.bf16.xpose.msra.mxu0 %v922
      %977 = vmatmul.bf16.gmra.mxu0 %v919
      %v978 = vpop.f32.mrf.mxu0
      %v979 = vadd.f32 %v822, %v978
      %v980 = vpop.f32.mrf.mxu0
      %981 = vdwg.mxu0
      %982 = vmatpush.bf16.xpose.msra.mxu0 %v967
      %983 = vmatpush.bf16.xpose.msra.mxu0 %v964
      %984 = vmatpush.bf16.xpose.msra.mxu0 %v961
      %985 = vmatpush.bf16.xpose.msra.mxu0 %v958
      %986 = vmatpush.bf16.xpose.msra.mxu0 %v955
      %987 = vmatpush.bf16.xpose.msra.mxu0 %v952
      %988 = vmatpush.bf16.xpose.msra.mxu0 %v949
      %989 = vmatpush.bf16.xpose.msra.mxu0 %v946
      %990 = vmatmul.bf16.gmra.mxu0 %v919
      %v991 = vpop.f32.mrf.mxu0
      %v992 = vadd.f32 %v835, %v991
      %v993 = vpop.f32.mrf.mxu0
      %994 = vdwg.mxu0
      %vm1011 = vcmask 1042432
      %vm1012 = vcmask 1046532
      %vm1013 = vmor %vm1011, %vm1012
      %v1014 = vrot.slane %v268, 5
      %v1015 = vrot.slane %v1014, 4
      %v1016 = vrot.slane %v269, 5
      %v1017 = vsel %vm1013, %v1015, %v1016
      %v1018 = vrot.slane %v1016, 4
      %v1019 = vrot.slane %v270, 5
      %v1020 = vsel %vm1013, %v1018, %v1019
      %v1021 = vrot.slane %v271, 5
      %v1022 = vrot.slane %v1021, 4
      %v1023 = vrot.slane %v272, 5
      %v1024 = vsel %vm1013, %v1022, %v1023
      %v1025 = vrot.slane %v1023, 4
      %v1026 = vrot.slane %v273, 5
      %v1027 = vsel %vm1013, %v1025, %v1026
      %v1028 = vrot.slane %v274, 5
      %v1029 = vrot.slane %v1028, 4
      %v1030 = vrot.slane %v275, 5
      %v1031 = vsel %vm1013, %v1029, %v1030
      %v1032 = vrot.slane %v1030, 4
      %v1033 = vrot.slane %v276, 5
      %v1034 = vsel %vm1013, %v1032, %v1033
      %v1035 = vrot.slane %v277, 5
      %v1036 = vrot.slane %v1035, 4
      %v1037 = vrot.slane %v278, 5
      %v1038 = vsel %vm1013, %v1036, %v1037
      %v1039 = vrot.slane %v1037, 4
      %v1040 = vrot.slane %v279, 5
      %v1041 = vsel %vm1013, %v1039, %v1040
      %v1042 = vrot.slane %v280, 5
      %v1043 = vrot.slane %v1042, 4
      %v1044 = vrot.slane %v281, 5
      %v1045 = vsel %vm1013, %v1043, %v1044
      %v1046 = vrot.slane %v1044, 4
      %v1047 = vrot.slane %v282, 5
      %v1048 = vsel %vm1013, %v1046, %v1047
      %v1049 = vrot.slane %v283, 5
      %v1050 = vrot.slane %v1049, 4
      %v1051 = vrot.slane %v284, 5
      %v1052 = vsel %vm1013, %v1050, %v1051
      %v1053 = vrot.slane %v1051, 4
      %v1054 = vrot.slane %v285, 5
      %v1055 = vsel %vm1013, %v1053, %v1054
      %v1056 = vrot.slane %v286, 5
      %v1057 = vrot.slane %v1056, 4
      %v1058 = vrot.slane %v287, 5
      %v1059 = vsel %vm1013, %v1057, %v1058
      %v1060 = vrot.slane %v1058, 4
      %v1061 = vrot.slane %v288, 5
      %v1062 = vsel %vm1013, %v1060, %v1061
      %v1063 = vrot.slane %v289, 5
      %v1064 = vrot.slane %v1063, 4
      %v1065 = vrot.slane %v290, 5
      %v1066 = vsel %vm1013, %v1064, %v1065
      %v1067 = vrot.slane %v1065, 4
      %v1068 = vrot.slane %v291, 5
      %v1069 = vsel %vm1013, %v1067, %v1068
      %v1070 = vrot.slane %v292, 5
      %v1071 = vrot.slane %v1070, 4
      %v1072 = vrot.slane %v293, 5
      %v1073 = vsel %vm1013, %v1071, %v1072
      %v1074 = vrot.slane %v1072, 4
      %v1075 = vrot.slane %v294, 5
      %v1076 = vsel %vm1013, %v1074, %v1075
      %v1077 = vrot.slane %v295, 5
      %v1078 = vrot.slane %v1077, 4
      %v1079 = vrot.slane %v296, 5
      %v1080 = vsel %vm1013, %v1078, %v1079
      %v1081 = vrot.slane %v1079, 4
      %v1082 = vrot.slane %v297, 5
      %v1083 = vsel %vm1013, %v1081, %v1082
      %v1084 = vrot.slane %v298, 5
      %v1085 = vrot.slane %v1084, 4
      %v1086 = vrot.slane %v299, 5
      %v1087 = vsel %vm1013, %v1085, %v1086
      %v1088 = vrot.slane %v1086, 4
      %v1089 = vrot.slane %v300, 5
      %v1090 = vsel %vm1013, %v1088, %v1089
      %v1091 = vrot.slane %v301, 5
      %v1092 = vrot.slane %v1091, 4
      %v1093 = vrot.slane %v302, 5
      %v1094 = vsel %vm1013, %v1092, %v1093
      %v1095 = vrot.slane %v1093, 4
      %v1096 = vrot.slane %v303, 5
      %v1097 = vsel %vm1013, %v1095, %v1096
      %v1098 = vrot.slane %v304, 5
      %v1099 = vrot.slane %v1098, 4
      %v1100 = vrot.slane %v305, 5
      %v1101 = vsel %vm1013, %v1099, %v1100
      %v1102 = vrot.slane %v1100, 4
      %v1103 = vrot.slane %v306, 5
      %v1104 = vsel %vm1013, %v1102, %v1103
      %v1105 = vrot.slane %v307, 5
      %v1106 = vrot.slane %v1105, 4
      %v1107 = vrot.slane %v308, 5
      %v1108 = vsel %vm1013, %v1106, %v1107
      %v1109 = vrot.slane %v1107, 4
      %v1110 = vrot.slane %v309, 5
      %v1111 = vsel %vm1013, %v1109, %v1110
      %v1112 = vrot.slane %v310, 5
      %v1113 = vrot.slane %v1112, 4
      %v1114 = vrot.slane %v311, 5
      %v1115 = vsel %vm1013, %v1113, %v1114
      %v1116 = vrot.slane %v1114, 4
      %v1117 = vrot.slane %v312, 5
      %v1118 = vsel %vm1013, %v1116, %v1117
      %v1119 = vrot.slane %v313, 5
      %v1120 = vrot.slane %v1119, 4
      %v1121 = vrot.slane %v314, 5
      %v1122 = vsel %vm1013, %v1120, %v1121
      %v1123 = vrot.slane %v1121, 4
      %v1124 = vrot.slane %v315, 5
      %v1125 = vsel %vm1013, %v1123, %v1124
      %s1126 = scalar_lea.vmem %s244, 8
      %v1127 = vld [vmem:[%s1126] sm:$0xf]
      %v1128 = vunpack.c.l.b16 %v1017
      %v1129 = vunpack.c.l.b16 %v1020
      %v1130 = vunpack.c.l.b16 %v1024
      %v1131 = vunpack.c.l.b16 %v1027
      %v1132 = vunpack.c.l.b16 %v1031
      %v1133 = vunpack.c.l.b16 %v1034
      %v1134 = vunpack.c.l.b16 %v1038
      %v1135 = vunpack.c.l.b16 %v1041
      %v1136 = vunpack.c.l.b16 %v1045
      %v1137 = vunpack.c.l.b16 %v1048
      %v1138 = vunpack.c.l.b16 %v1052
      %v1139 = vunpack.c.l.b16 %v1055
      %v1140 = vunpack.c.l.b16 %v1059
      %v1141 = vunpack.c.l.b16 %v1062
      %v1142 = vunpack.c.l.b16 %v1066
      %v1143 = vunpack.c.l.b16 %v1069
      %v1144 = vunpack.c.l.b16 %v1073
      %v1145 = vunpack.c.l.b16 %v1076
      %v1146 = vunpack.c.l.b16 %v1080
      %v1147 = vunpack.c.l.b16 %v1083
      %v1148 = vunpack.c.l.b16 %v1087
      %v1149 = vunpack.c.l.b16 %v1090
      %v1150 = vunpack.c.l.b16 %v1094
      %v1151 = vunpack.c.l.b16 %v1097
      %v1152 = vunpack.c.l.b16 %v1101
      %v1153 = vunpack.c.l.b16 %v1104
      %v1154 = vunpack.c.l.b16 %v1108
      %v1155 = vunpack.c.l.b16 %v1111
      %v1156 = vunpack.c.l.b16 %v1115
      %v1157 = vunpack.c.l.b16 %v1118
      %v1158 = vunpack.c.l.b16 %v1122
      %v1159 = vunpack.c.l.b16 %v1125
      %v1160 = vpack.c.b16 %v1129, %v1128
      %v1161 = vpack.c.b16 %v1131, %v1130
      %v1162 = vpack.c.b16 %v1133, %v1132
      %v1163 = vpack.c.b16 %v1135, %v1134
      %v1164 = vpack.c.b16 %v1137, %v1136
      %v1165 = vpack.c.b16 %v1139, %v1138
      %v1166 = vpack.c.b16 %v1141, %v1140
      %v1167 = vpack.c.b16 %v1143, %v1142
      %v1168 = vpack.c.b16 %v1145, %v1144
      %v1169 = vpack.c.b16 %v1147, %v1146
      %v1170 = vpack.c.b16 %v1149, %v1148
      %v1171 = vpack.c.b16 %v1151, %v1150
      %v1172 = vpack.c.b16 %v1153, %v1152
      %v1173 = vpack.c.b16 %v1155, %v1154
      %v1174 = vpack.c.b16 %v1157, %v1156
      %v1175 = vpack.c.b16 %v1159, %v1158
      %v1177 = vsel %vm760, %v1127, 0
      %v1180 = vsel %vm760, %v1160, 0
      %v1183 = vsel %vm760, %v1161, 0
      %v1186 = vsel %vm760, %v1162, 0
      %v1189 = vsel %vm760, %v1163, 0
      %v1192 = vsel %vm760, %v1164, 0
      %v1195 = vsel %vm760, %v1165, 0
      %v1198 = vsel %vm760, %v1166, 0
      %v1201 = vsel %vm760, %v1167, 0
      %v1204 = vsel %vm760, %v1168, 0
      %v1207 = vsel %vm760, %v1169, 0
      %v1210 = vsel %vm760, %v1170, 0
      %v1213 = vsel %vm760, %v1171, 0
      %v1216 = vsel %vm760, %v1172, 0
      %v1219 = vsel %vm760, %v1173, 0
      %v1222 = vsel %vm760, %v1174, 0
      %v1225 = vsel %vm760, %v1175, 0
      %1227 = vmatpush.bf16.xpose.msra.mxu0 %v1201
      %1228 = vmatpush.bf16.xpose.msra.mxu0 %v1198
      %1229 = vmatpush.bf16.xpose.msra.mxu0 %v1195
      %1230 = vmatpush.bf16.xpose.msra.mxu0 %v1192
      %1231 = vmatpush.bf16.xpose.msra.mxu0 %v1189
      %1232 = vmatpush.bf16.xpose.msra.mxu0 %v1186
      %1233 = vmatpush.bf16.xpose.msra.mxu0 %v1183
      %1234 = vmatpush.bf16.xpose.msra.mxu0 %v1180
      %1235 = vmatmul.bf16.gmra.mxu0 %v1177
      %v1236 = vpop.f32.mrf.mxu0
      %v1237 = vadd.f32 0.0, %v1236
      %v1238 = vpop.f32.mrf.mxu0
      %1239 = vdwg.mxu0
      %1240 = vmatpush.bf16.xpose.msra.mxu0 %v1225
      %1241 = vmatpush.bf16.xpose.msra.mxu0 %v1222
      %1242 = vmatpush.bf16.xpose.msra.mxu0 %v1219
      %1243 = vmatpush.bf16.xpose.msra.mxu0 %v1216
      %1244 = vmatpush.bf16.xpose.msra.mxu0 %v1213
      %1245 = vmatpush.bf16.xpose.msra.mxu0 %v1210
      %1246 = vmatpush.bf16.xpose.msra.mxu0 %v1207
      %1247 = vmatpush.bf16.xpose.msra.mxu0 %v1204
      %1248 = vmatmul.bf16.gmra.mxu0 %v1177
      %v1249 = vpop.f32.mrf.mxu0
      %v1250 = vadd.f32 0.0, %v1249
      %v1251 = vpop.f32.mrf.mxu0
      %1252 = vdwg.mxu0
      %v1253 = vadd.f32 %v979, %v1237
      %v1254 = vadd.f32 %v992, %v1250
      %s1255 = scalar_lea.vmem %s244, 12
      %v1256 = vld [vmem:[%s1255] sm:$0xf]
      %v1259 = vunpack.c.l.b16 %v316
      %v1260 = vunpack.c.l.b16 %v317
      %v1261 = vpack.c.b16 %v1260, %v1259
      %v1263 = vsel %vm760, %v1256, 0
      %v1266 = vsel %vm760, %v1261, 0
      %1268 = vmatpush.bf16.xpose.msra.mxu0 %v946
      %1269 = vmatpush.bf16.xpose.msra.mxu0 %v943
      %1270 = vmatpush.bf16.xpose.msra.mxu0 %v940
      %1271 = vmatpush.bf16.xpose.msra.mxu0 %v937
      %1272 = vmatpush.bf16.xpose.msra.mxu0 %v934
      %1273 = vmatpush.bf16.xpose.msra.mxu0 %v931
      %1274 = vmatpush.bf16.xpose.msra.mxu0 %v928
      %1275 = vmatpush.bf16.xpose.msra.mxu0 %v925
      %1276 = vmatmul.bf16.gmra.mxu0 %v1263
      %v1277 = vpop.f32.mrf.mxu0
      %v1278 = vadd.f32 0.0, %v1277
      %v1279 = vpop.f32.mrf.mxu0
      %1280 = vdwg.mxu0
      %1281 = vmatpush.bf16.xpose.msra.mxu0 %v1266
      %1282 = vmatpush.bf16.xpose.msra.mxu0 %v967
      %1283 = vmatpush.bf16.xpose.msra.mxu0 %v964
      %1284 = vmatpush.bf16.xpose.msra.mxu0 %v961
      %1285 = vmatpush.bf16.xpose.msra.mxu0 %v958
      %1286 = vmatpush.bf16.xpose.msra.mxu0 %v955
      %1287 = vmatpush.bf16.xpose.msra.mxu0 %v952
      %1288 = vmatpush.bf16.xpose.msra.mxu0 %v949
      %1289 = vmatmul.bf16.gmra.mxu0 %v1263
      %v1290 = vpop.f32.mrf.mxu0
      %v1291 = vadd.f32 0.0, %v1290
      %v1292 = vpop.f32.mrf.mxu0
      %1293 = vdwg.mxu0
      %v1294 = vadd.f32 %v1253, %v1278
      %v1295 = vadd.f32 %v1254, %v1291
      %v1297 = vshrl.u32 %v316, 16
      %v1299 = vrot.slane %v1297, 4
      %v1300 = vshll.u32 %v316, 16
      %v1302 = vrot.slane %v1300, 5
      %v1303 = vor.u32 %v1299, %v1302
      %v1304 = vrot.slane %v1303, 4
      %v1306 = vshll.u32 %v317, 16
      %v1308 = vrot.slane %v1306, 5
      %v1309 = vsel %vm325, %v1304, %v1308
      %v1310 = vshrl.u32 %v317, 16
      %v1312 = vrot.slane %v1310, 4
      %v1313 = vor.u32 %v1312, %v1308
      %v1314 = vrot.slane %v1313, 4
      %v1316 = vshll.u32 %v318, 16
      %v1318 = vrot.slane %v1316, 5
      %v1319 = vsel %vm325, %v1314, %v1318
      %s1320 = scalar_lea.vmem %s244, 16
      %v1321 = vld [vmem:[%s1320] sm:$0xf]
      %v1322 = vunpack.c.l.b16 %v1309
      %v1323 = vunpack.c.l.b16 %v1319
      %v1324 = vpack.c.b16 %v1323, %v1322
      %v1326 = vsel %vm760, %v1321, 0
      %v1329 = vsel %vm760, %v1324, 0
      %1331 = vmatpush.bf16.xpose.msra.mxu0 %v789
      %1332 = vmatpush.bf16.xpose.msra.mxu0 %v786
      %1333 = vmatpush.bf16.xpose.msra.mxu0 %v783
      %1334 = vmatpush.bf16.xpose.msra.mxu0 %v780
      %1335 = vmatpush.bf16.xpose.msra.mxu0 %v777
      %1336 = vmatpush.bf16.xpose.msra.mxu0 %v774
      %1337 = vmatpush.bf16.xpose.msra.mxu0 %v771
      %1338 = vmatpush.bf16.xpose.msra.mxu0 %v768
      %1339 = vmatmul.bf16.gmra.mxu0 %v1326
      %v1340 = vpop.f32.mrf.mxu0
      %v1341 = vadd.f32 0.0, %v1340
      %v1342 = vpop.f32.mrf.mxu0
      %1343 = vdwg.mxu0
      %1344 = vmatpush.bf16.xpose.msra.mxu0 %v1329
      %1345 = vmatpush.bf16.xpose.msra.mxu0 %v810
      %1346 = vmatpush.bf16.xpose.msra.mxu0 %v807
      %1347 = vmatpush.bf16.xpose.msra.mxu0 %v804
      %1348 = vmatpush.bf16.xpose.msra.mxu0 %v801
      %1349 = vmatpush.bf16.xpose.msra.mxu0 %v798
      %1350 = vmatpush.bf16.xpose.msra.mxu0 %v795
      %1351 = vmatpush.bf16.xpose.msra.mxu0 %v792
      %1352 = vmatmul.bf16.gmra.mxu0 %v1326
      %v1353 = vpop.f32.mrf.mxu0
      %v1354 = vadd.f32 0.0, %v1353
      %v1355 = vpop.f32.mrf.mxu0
      %1356 = vdwg.mxu0
      %v1357 = vadd.f32 %v1294, %v1341
      %v1358 = vadd.f32 %v1295, %v1354
      %v1360 = vrot.slane %v316, 5
      %v1361 = vrot.slane %v1360, 4
      %v1362 = vrot.slane %v317, 5
      %v1363 = vsel %vm1013, %v1361, %v1362
      %v1364 = vrot.slane %v1362, 4
      %v1365 = vrot.slane %v318, 5
      %v1366 = vsel %vm1013, %v1364, %v1365
      %s1367 = scalar_lea.vmem %s244, 20
      %v1368 = vld [vmem:[%s1367] sm:$0xf]
      %v1369 = vunpack.c.l.b16 %v1363
      %v1370 = vunpack.c.l.b16 %v1366
      %v1371 = vpack.c.b16 %v1370, %v1369
      %v1373 = vsel %vm760, %v1368, 0
      %v1376 = vsel %vm760, %v1371, 0
      %1378 = vmatpush.bf16.xpose.msra.mxu0 %v1204
      %1379 = vmatpush.bf16.xpose.msra.mxu0 %v1201
      %1380 = vmatpush.bf16.xpose.msra.mxu0 %v1198
      %1381 = vmatpush.bf16.xpose.msra.mxu0 %v1195
      %1382 = vmatpush.bf16.xpose.msra.mxu0 %v1192
      %1383 = vmatpush.bf16.xpose.msra.mxu0 %v1189
      %1384 = vmatpush.bf16.xpose.msra.mxu0 %v1186
      %1385 = vmatpush.bf16.xpose.msra.mxu0 %v1183
      %1386 = vmatmul.bf16.gmra.mxu0 %v1373
      %v1387 = vpop.f32.mrf.mxu0
      %v1388 = vadd.f32 0.0, %v1387
      %v1389 = vpop.f32.mrf.mxu0
      %1390 = vdwg.mxu0
      %1391 = vmatpush.bf16.xpose.msra.mxu0 %v1376
      %1392 = vmatpush.bf16.xpose.msra.mxu0 %v1225
      %1393 = vmatpush.bf16.xpose.msra.mxu0 %v1222
      %1394 = vmatpush.bf16.xpose.msra.mxu0 %v1219
      %1395 = vmatpush.bf16.xpose.msra.mxu0 %v1216
      %1396 = vmatpush.bf16.xpose.msra.mxu0 %v1213
      %1397 = vmatpush.bf16.xpose.msra.mxu0 %v1210
      %1398 = vmatpush.bf16.xpose.msra.mxu0 %v1207
      %1399 = vmatmul.bf16.gmra.mxu0 %v1373
      %v1400 = vpop.f32.mrf.mxu0
      %v1401 = vadd.f32 0.0, %v1400
      %v1402 = vpop.f32.mrf.mxu0
      %1403 = vdwg.mxu0
      %v1404 = vadd.f32 %v1357, %v1388
      %v1405 = vadd.f32 %v1358, %v1401
      %s1406 = scalar_lea.vmem %s244, 24
      %v1407 = vld [vmem:[%s1406] sm:$0xf]
      %v1410 = vunpack.c.l.b16 %v319
      %v1411 = vunpack.c.l.b16 %v320
      %v1412 = vpack.c.b16 %v1411, %v1410
      %v1414 = vsel %vm760, %v1407, 0
      %v1417 = vsel %vm760, %v1412, 0
      %1419 = vmatpush.bf16.xpose.msra.mxu0 %v949
      %1420 = vmatpush.bf16.xpose.msra.mxu0 %v946
      %1421 = vmatpush.bf16.xpose.msra.mxu0 %v943
      %1422 = vmatpush.bf16.xpose.msra.mxu0 %v940
      %1423 = vmatpush.bf16.xpose.msra.mxu0 %v937
      %1424 = vmatpush.bf16.xpose.msra.mxu0 %v934
      %1425 = vmatpush.bf16.xpose.msra.mxu0 %v931
      %1426 = vmatpush.bf16.xpose.msra.mxu0 %v928
      %1427 = vmatmul.bf16.gmra.mxu0 %v1414
      %v1428 = vpop.f32.mrf.mxu0
      %v1429 = vadd.f32 0.0, %v1428
      %v1430 = vpop.f32.mrf.mxu0
      %1431 = vdwg.mxu0
      %1432 = vmatpush.bf16.xpose.msra.mxu0 %v1417
      %1433 = vmatpush.bf16.xpose.msra.mxu0 %v1266
      %1434 = vmatpush.bf16.xpose.msra.mxu0 %v967
      %1435 = vmatpush.bf16.xpose.msra.mxu0 %v964
      %1436 = vmatpush.bf16.xpose.msra.mxu0 %v961
      %1437 = vmatpush.bf16.xpose.msra.mxu0 %v958
      %1438 = vmatpush.bf16.xpose.msra.mxu0 %v955
      %1439 = vmatpush.bf16.xpose.msra.mxu0 %v952
      %1440 = vmatmul.bf16.gmra.mxu0 %v1414
      %v1441 = vpop.f32.mrf.mxu0
      %v1442 = vadd.f32 0.0, %v1441
      %v1443 = vpop.f32.mrf.mxu0
      %1444 = vdwg.mxu0
      %v1445 = vadd.f32 %v1404, %v1429
      %v1446 = vadd.f32 %v1405, %v1442
      %v1448 = vshrl.u32 %v319, 16
      %v1450 = vrot.slane %v1448, 4
      %v1451 = vshll.u32 %v319, 16
      %v1453 = vrot.slane %v1451, 5
      %v1454 = vor.u32 %v1450, %v1453
      %v1455 = vrot.slane %v1454, 4
      %v1457 = vshll.u32 %v320, 16
      %v1459 = vrot.slane %v1457, 5
      %v1460 = vsel %vm325, %v1455, %v1459
      %v1461 = vshrl.u32 %v320, 16
      %v1463 = vrot.slane %v1461, 4
      %v1464 = vor.u32 %v1463, %v1459
      %v1465 = vrot.slane %v1464, 4
      %v1467 = vshll.u32 %v321, 16
      %v1469 = vrot.slane %v1467, 5
      %v1470 = vsel %vm325, %v1465, %v1469
      %s1471 = scalar_lea.vmem %s244, 28
      %v1472 = vld [vmem:[%s1471] sm:$0xf]
      %v1473 = vunpack.c.l.b16 %v1460
      %v1474 = vunpack.c.l.b16 %v1470
      %v1475 = vpack.c.b16 %v1474, %v1473
      %v1477 = vsel %vm760, %v1472, 0
      %v1480 = vsel %vm760, %v1475, 0
      %1482 = vmatpush.bf16.xpose.msra.mxu0 %v792
      %1483 = vmatpush.bf16.xpose.msra.mxu0 %v789
      %1484 = vmatpush.bf16.xpose.msra.mxu0 %v786
      %1485 = vmatpush.bf16.xpose.msra.mxu0 %v783
      %1486 = vmatpush.bf16.xpose.msra.mxu0 %v780
      %1487 = vmatpush.bf16.xpose.msra.mxu0 %v777
      %1488 = vmatpush.bf16.xpose.msra.mxu0 %v774
      %1489 = vmatpush.bf16.xpose.msra.mxu0 %v771
      %1490 = vmatmul.bf16.gmra.mxu0 %v1477
      %v1491 = vpop.f32.mrf.mxu0
      %v1492 = vadd.f32 0.0, %v1491
      %v1493 = vpop.f32.mrf.mxu0
      %1494 = vdwg.mxu0
      %1495 = vmatpush.bf16.xpose.msra.mxu0 %v1480
      %1496 = vmatpush.bf16.xpose.msra.mxu0 %v1329
      %1497 = vmatpush.bf16.xpose.msra.mxu0 %v810
      %1498 = vmatpush.bf16.xpose.msra.mxu0 %v807
      %1499 = vmatpush.bf16.xpose.msra.mxu0 %v804
      %1500 = vmatpush.bf16.xpose.msra.mxu0 %v801
      %1501 = vmatpush.bf16.xpose.msra.mxu0 %v798
      %1502 = vmatpush.bf16.xpose.msra.mxu0 %v795
      %1503 = vmatmul.bf16.gmra.mxu0 %v1477
      %v1504 = vpop.f32.mrf.mxu0
      %v1505 = vadd.f32 0.0, %v1504
      %v1506 = vpop.f32.mrf.mxu0
      %1507 = vdwg.mxu0
      %v1508 = vadd.f32 %v1445, %v1492
      %v1509 = vadd.f32 %v1446, %v1505
      %v1511 = vrot.slane %v319, 5
      %v1512 = vrot.slane %v1511, 4
      %v1513 = vrot.slane %v320, 5
      %v1514 = vsel %vm1013, %v1512, %v1513
      %v1515 = vrot.slane %v1513, 4
      %v1516 = vrot.slane %v321, 5
      %v1517 = vsel %vm1013, %v1515, %v1516
      %s1518 = scalar_lea.vmem %s244, 32
      %v1519 = vld [vmem:[%s1518] sm:$0xf]
      %v1520 = vunpack.c.l.b16 %v1514
      %v1521 = vunpack.c.l.b16 %v1517
      %v1522 = vpack.c.b16 %v1521, %v1520
      %v1524 = vsel %vm760, %v1519, 0
      %v1527 = vsel %vm760, %v1522, 0
      %1529 = vmatpush.bf16.xpose.msra.mxu0 %v1207
      %1530 = vmatpush.bf16.xpose.msra.mxu0 %v1204
      %1531 = vmatpush.bf16.xpose.msra.mxu0 %v1201
      %1532 = vmatpush.bf16.xpose.msra.mxu0 %v1198
      %1533 = vmatpush.bf16.xpose.msra.mxu0 %v1195
      %1534 = vmatpush.bf16.xpose.msra.mxu0 %v1192
      %1535 = vmatpush.bf16.xpose.msra.mxu0 %v1189
      %1536 = vmatpush.bf16.xpose.msra.mxu0 %v1186
      %1537 = vmatmul.bf16.gmra.mxu0 %v1524
      %v1538 = vpop.f32.mrf.mxu0
      %v1539 = vadd.f32 0.0, %v1538
      %v1540 = vpop.f32.mrf.mxu0
      %1541 = vdwg.mxu0
      %1542 = vmatpush.bf16.xpose.msra.mxu0 %v1527
      %1543 = vmatpush.bf16.xpose.msra.mxu0 %v1376
      %1544 = vmatpush.bf16.xpose.msra.mxu0 %v1225
      %1545 = vmatpush.bf16.xpose.msra.mxu0 %v1222
      %1546 = vmatpush.bf16.xpose.msra.mxu0 %v1219
      %1547 = vmatpush.bf16.xpose.msra.mxu0 %v1216
      %1548 = vmatpush.bf16.xpose.msra.mxu0 %v1213
      %1549 = vmatpush.bf16.xpose.msra.mxu0 %v1210
      %1550 = vmatmul.bf16.gmra.mxu0 %v1524
      %v1551 = vpop.f32.mrf.mxu0
      %v1552 = vadd.f32 0.0, %v1551
      %v1553 = vpop.f32.mrf.mxu0
      %1554 = vdwg.mxu0
      %v1555 = vadd.f32 %v1508, %v1539
      %v1556 = vadd.f32 %v1509, %v1552
      %v1557 = vld [vmem:[%s253] sm:$0xff]
      %v1558 = vld [vmem:[%s253 + $0x8] sm:$0xff]
      %v1559 = vadd.f32 %v1557, %v1555
      %v1560 = vadd.f32 %v1558, %v1556
      %1561 = vst [vmem:[%s253] sm:$0xff] %v1559
      %1562 = vst [vmem:[%s253 + $0x8] sm:$0xff] %v1560
      %p1563 = scmp.eq.s32.totalorder %s22, 2
      // Predicated region
      $region33: #{basic_conv3d.2} parent=27 // pred_check
        %p1564 = pneg %p1563
      $region34: #{basic_conv3d.2} parent=27 // pred_check_branch
        %1566 = sbr.rel (%p1564) target = $region36
      $region35: #{basic_conv3d.2} parent=27 // pred_region
        %v1567 = vld [vmem:[%s253] sm:$0xff]
        %v1568 = vld [vmem:[%s253 + $0x8] sm:$0xff]
        %v1569 = vadd.f32 %v1567, %v1568
        %1570 = vadd.xlane.f32.xlu0 %v1569
        %v1571 = vpop.xlane.xlu0 %1570
        %v1572 = vmul.f32 %v1567, %v1567
        %v1573 = vmul.f32 %v1568, %v1568
        %v1574 = vadd.f32 %v1572, %v1573
        %1575 = vadd.xlane.f32.xlu0 %v1574
        %v1576 = vpop.xlane.xlu0 %1575
        %vm1577 = vcmask 7168
        %v1578 = vsel %vm1577, %v1571, %v1576
        %vm1579 = vcmask 15360
        %1580 = vst.msk [vmem:[%s261] sm:$0xff] %vm1579, %v1578
      $region36: #{basic_conv3d.2} parent=27 // pred_fallthru
        _
      %p1581 = scmp.lt.s32.totalorder %s20, 1
      %s1582 = scalar_select %p1581, %s20, 1
      %p1583 = scmp.lt.s32.totalorder %s21, 15
      %s1584 = scalar_select %p1583, %s21, 15
      %s1585 = smul.addr %s1584, 2
      %s1586 = smul.addr %s1582, 32
      %s1587 = sadd.s32 %s1585, %s1586
      %s1588 = smul.addr %s1587, 8
      %s1589 = scalar_lea.vmem %s2, %s1588
      %p1590 = scmp.lt.s32.totalorder %s20, 1
      %s1591 = scalar_select %p1590, %s20, 1
      %p1592 = scmp.lt.s32.totalorder %s21, 15
      %s1593 = scalar_select %p1592, %s21, 15
      %s1594 = smul.addr %s1591, 16
      %s1595 = sadd.s32 %s1593, %s1594
      %s1596 = smul.addr %s1595, 8
      %s1597 = scalar_lea.vmem %s3, %s1596
      // Predicated region
      $region37: #{basic_conv3d.2} parent=27 // pred_check
        %p1598 = pneg %p110
      $region38: #{basic_conv3d.2} parent=27 // pred_check_branch
        %1600 = sbr.rel (%p1598) target = $region40
      $region39: #{basic_conv3d.2} parent=27 // pred_region
        _
      $region40: #{basic_conv3d.2} parent=27 // pred_fallthru
        _
      // Predicated region
      $region41: #{basic_conv3d.2} parent=27 // pred_check
        %p1601 = pneg %p138
      $region42: #{basic_conv3d.2} parent=27 // pred_check_branch
        %1603 = sbr.rel (%p1601) target = $region44
      $region43: #{basic_conv3d.2} parent=27 // pred_region
        _
      $region44: #{basic_conv3d.2} parent=27 // pred_fallthru
        _
    $region28: #{basic_conv3d.2} parent=5 // pred_fallthru
      _
    %p1604 = scmp.le.s32.totalorder 2, %s10
    // Predicated region
    $region45: #{basic_conv3d.2} parent=5 // pred_check
      %p1605 = pneg %p1604
    $region46: #{basic_conv3d.2} parent=5 // pred_check_branch
      %1607 = sbr.rel (%p1605) target = $region48
    $region47: #{basic_conv3d.2} parent=5 // pred_region
      %s1608 = ssub.s32 %s10, 2
      // Predicated region
      $region49: #{basic_conv3d.2} parent=47 // pred_check
        %p1609 = pneg %p116
      $region50: #{basic_conv3d.2} parent=47 // pred_check_branch
        %1611 = sbr.rel (%p1609) target = $region52
      $region51: #{basic_conv3d.2} parent=47 // pred_region
        %p1612 = scmp.lt.s32.totalorder %s23, 1
        %s1613 = scalar_select %p1612, %s23, 1
        %p1614 = scmp.lt.s32.totalorder %s24, 15
        %s1615 = scalar_select %p1614, %s24, 15
        %s1616 = smul.addr %s1615, 2
        %s1617 = smul.addr %s1613, 32
        %s1618 = sadd.s32 %s1616, %s1617
        %s1619 = smul.addr %s1618, 8
        %s1620 = scalar_lea.vmem %s2, %s1619
      $region52: #{basic_conv3d.2} parent=47 // pred_fallthru
        _
      // Predicated region
      $region53: #{basic_conv3d.2} parent=47 // pred_check
        %p1621 = pneg %p144
      $region54: #{basic_conv3d.2} parent=47 // pred_check_branch
        %1623 = sbr.rel (%p1621) target = $region56
      $region55: #{basic_conv3d.2} parent=47 // pred_region
        %p1624 = scmp.lt.s32.totalorder %s23, 1
        %s1625 = scalar_select %p1624, %s23, 1
        %p1626 = scmp.lt.s32.totalorder %s24, 15
        %s1627 = scalar_select %p1626, %s24, 15
        %s1628 = smul.addr %s1625, 16
        %s1629 = sadd.s32 %s1627, %s1628
        %s1630 = smul.addr %s1629, 8
        %s1631 = scalar_lea.vmem %s3, %s1630
      $region56: #{basic_conv3d.2} parent=47 // pred_fallthru
        _
    $region48: #{basic_conv3d.2} parent=5 // pred_fallthru
      _
  $region6: #{basic_conv3d.2} parent=0 // loop_footer
    %s14 = sadd.s32 1, %s10
  $region7: #{basic_conv3d.2} parent=0 // loop_footer_branch
    %9 = sbr.rel target = $region3
  $region8: #{basic_conv3d.2} parent=0 // loop_exit
    _

</llo_original>
